<compile_context>
chip_gen: v7x
topology: tpu7x:2x2x1
jax: 0.10.0
libtpu: 0.0.40
codegen_flags: <defaults>
</compile_context>

<pallas_src>
import jax
import jax.numpy as jnp
from jax.experimental import pallas as pl
from jax.experimental.pallas import tpu as pltpu

FEAT_COMP_DIM = 102
FEAT_LOC_DIM = 23
WIDE_DIM = FEAT_COMP_DIM + FEAT_LOC_DIM            # 125
WIDE_PAD = 128                                     # lane-aligned wide-feature width
EMB_DIM = 64                                       # _embedding_dim
DEEP_DIM = 64                                      # _deep_feat_dim
SHARED_DIM = 64                                    # net_shared output width
NUM_CLASSES = 2
CLS_PAD = 64                                       # classifier output padded width
EMB_NUM = 2405                                     # embedding_num
EMB_NUM_PAD = ((EMB_NUM + 127) // 128) * 128       # 2432, lane-aligned contraction dim
PACK_DIM = DEEP_DIM + CLS_PAD                      # 128-lane packed output slab
NEG_SLOPE = 0.01                                   # nn.LeakyReLU default


def _leaky_relu(x):
    return jnp.where(x > 0, x, NEG_SLOPE * x)


def _round_up(x, m):
    return ((x + m - 1) // m) * m


def deep_wide_kernel(wide_ref, id_ref, emb_ref,
                     w_deep_ref, b_deep_ref,
                     w_sh_wide_ref, w_sh_deep_ref, b_sh_ref,
                     w_cls_ref, b_cls_ref,
                     out_ref):
    tb = wide_ref.shape[0]

    # nn.Embedding(id_loc): one-hot @ table gather, done on the MXU.
    ids = id_ref[...]                                                    # (TB, 1) int32
    col = jax.lax.broadcasted_iota(jnp.int32, (tb, EMB_NUM_PAD), 1)
    one_hot = (col == ids).astype(jnp.float32)                           # (TB, EMB_NUM_PAD)
    embed = jnp.dot(one_hot, emb_ref[...],
                    preferred_element_type=jnp.float32)                  # (TB, 64)

    # net_deep: Linear(64, 64) + LeakyReLU
    deep = _leaky_relu(
        jnp.dot(embed, w_deep_ref[...], preferred_element_type=jnp.float32)
        + b_deep_ref[...])

    # net_shared: Linear(125 + 64, 64) split as wide(128-padded) + deep parts,
    # Dropout(p=0.1) is identity in eval mode, then LeakyReLU.
    h = (jnp.dot(wide_ref[...], w_sh_wide_ref[...], preferred_element_type=jnp.float32)
         + jnp.dot(deep, w_sh_deep_ref[...], preferred_element_type=jnp.float32)
         + b_sh_ref[...])
    h = _leaky_relu(h)

    # classifier: Linear(64, 2), zero-padded to 64 output lanes.
    logits = jnp.dot(h, w_cls_ref[...], preferred_element_type=jnp.float32) + b_cls_ref[...]

    # Single lane-dense 128-wide store: [deep_feat(64) | logits(2) | zero pad].
    out_ref[...] = jnp.concatenate([deep, logits], axis=-1)


def init_params(key):
    """Deterministic PyTorch-style init; weights stored in x @ W layout (fin, fout)."""
    def linear(k, fin, fout):
        k1, k2 = jax.random.split(k)
        bound = 1.0 / (fin ** 0.5)
        w = jax.random.uniform(k1, (fin, fout), jnp.float32, -bound, bound)
        b = jax.random.uniform(k2, (1, fout), jnp.float32, -bound, bound)
        return w, b

    k_emb, k_deep, k_sh, k_cls = jax.random.split(key, 4)
    p = {}
    p['emb'] = jax.random.normal(k_emb, (EMB_NUM, EMB_DIM), jnp.float32)   # nn.Embedding ~ N(0,1)
    p['w_deep'], p['b_deep'] = linear(k_deep, EMB_DIM, DEEP_DIM)
    p['w_shared'], p['b_shared'] = linear(k_sh, WIDE_DIM + DEEP_DIM, SHARED_DIM)
    p['w_cls'], p['b_cls'] = linear(k_cls, SHARED_DIM, NUM_CLASSES)
    return p


def naive_deep_wide_forward(feat_comp, feat_loc, id_loc, params, *, max_tb=128):
    B = feat_comp.shape[0]
    assert feat_comp.shape == (B, FEAT_COMP_DIM)
    assert feat_loc.shape == (B, FEAT_LOC_DIM)

    # wide_feat = cat([feat_comp, feat_loc], dim=1)  (also returned as an output).
    wide = jnp.concatenate([feat_comp, feat_loc], axis=1)                # (B, 125)

    # Batch tile: TB rows per grid step (multiple of 8, capped at max_tb).
    tb = min(max_tb, _round_up(B, 8))
    b_pad = _round_up(B, tb)

    wide_pad = jnp.pad(wide, ((0, b_pad - B), (0, WIDE_PAD - WIDE_DIM)))
    ids = jnp.pad(id_loc.astype(jnp.int32).reshape(B, 1), ((0, b_pad - B), (0, 0)))

    # Padded / split weights (zero padding -> no effect on the math).
    emb_pad = jnp.pad(params['emb'], ((0, EMB_NUM_PAD - EMB_NUM), (0, 0)))       # (2432, 64)
    w_sh = params['w_shared']                                                    # (189, 64)
    w_sh_wide = jnp.pad(w_sh[:WIDE_DIM], ((0, WIDE_PAD - WIDE_DIM), (0, 0)))     # (128, 64)
    w_sh_deep = w_sh[WIDE_DIM:]                                                  # (64, 64)
    w_cls_pad = jnp.pad(params['w_cls'], ((0, 0), (0, CLS_PAD - NUM_CLASSES)))   # (64, 64)
    b_cls_pad = jnp.pad(params['b_cls'], ((0, 0), (0, CLS_PAD - NUM_CLASSES)))   # (1, 64)

    consts = (emb_pad, params['w_deep'], params['b_deep'],
              w_sh_wide, w_sh_deep, params['b_shared'],
              w_cls_pad, b_cls_pad)

    def const_spec(arr):
        nd = arr.ndim
        return pl.BlockSpec(arr.shape, lambda i, _nd=nd: (0,) * _nd)

    in_specs = ([pl.BlockSpec((tb, WIDE_PAD), lambda i: (i, 0)),
                 pl.BlockSpec((tb, 1), lambda i: (i, 0))]
                + [const_spec(a) for a in consts])

    packed = pl.pallas_call(
        deep_wide_kernel,
        grid=(b_pad // tb,),
        in_specs=in_specs,
        out_specs=pl.BlockSpec((tb, PACK_DIM), lambda i: (i, 0)),
        out_shape=jax.ShapeDtypeStruct((b_pad, PACK_DIM), jnp.float32),
        compiler_params=pltpu.CompilerParams(dimension_semantics=("parallel",)),
    )(wide_pad, ids, *consts)

    deep_feat = packed[:B, :DEEP_DIM]
    outputs = packed[:B, DEEP_DIM:DEEP_DIM + NUM_CLASSES]
    return {'outputs': outputs, 'wide_feat': wide, 'deep_feat': deep_feat}


def naive_deep_wide_reference(feat_comp, feat_loc, id_loc, p):
    """Pure-JAX reference mirroring the PyTorch forward (eval mode)."""
    wide = jnp.concatenate([feat_comp, feat_loc], axis=1)
    embed = p['emb'][id_loc]
    deep = _leaky_relu(embed @ p['w_deep'] + p['b_deep'][0])
    all_feat = jnp.concatenate([wide, deep], axis=1)
    h = _leaky_relu(all_feat @ p['w_shared'] + p['b_shared'][0])   # Dropout is identity in eval
    out = h @ p['w_cls'] + p['b_cls'][0]
    return {'outputs': out, 'wide_feat': wide, 'deep_feat': deep}


if __name__ == "__main__":
    key = jax.random.PRNGKey(0)
    k_param, k_comp, k_loc, k_id = jax.random.split(key, 4)

    B = 8
    feat_comp = jax.random.normal(k_comp, (B, FEAT_COMP_DIM), jnp.float32)
    feat_loc = jax.random.normal(k_loc, (B, FEAT_LOC_DIM), jnp.float32)
    id_loc = jax.random.randint(k_id, (B,), 0, EMB_NUM, jnp.int32)
    params = init_params(k_param)

    result = naive_deep_wide_forward(feat_comp, feat_loc, id_loc, params)
    jax.block_until_ready(result)

    ref = naive_deep_wide_reference(feat_comp, feat_loc, id_loc, params)
    for name in ('outputs', 'wide_feat', 'deep_feat'):
        assert jnp.allclose(result[name], ref[name], atol=1e-4, rtol=1e-4), name

    print("KERNEL_OK")
</pallas_src>

<mosaic_0001>
module attributes {stable_mosaic.version = 11 : i64} {
  func.func @deep_wide_kernel(%arg0: i32, %arg1: memref<8x128xf32, #tpu.memory_space<vmem>>, %arg2: memref<8x1xi32, #tpu.memory_space<vmem>>, %arg3: memref<2432x64xf32, #tpu.memory_space<vmem>>, %arg4: memref<64x64xf32, #tpu.memory_space<vmem>>, %arg5: memref<1x64xf32, #tpu.memory_space<vmem>>, %arg6: memref<128x64xf32, #tpu.memory_space<vmem>>, %arg7: memref<64x64xf32, #tpu.memory_space<vmem>>, %arg8: memref<1x64xf32, #tpu.memory_space<vmem>>, %arg9: memref<64x64xf32, #tpu.memory_space<vmem>>, %arg10: memref<1x64xf32, #tpu.memory_space<vmem>>, %arg11: memref<8x128xf32, #tpu.memory_space<vmem>>) attributes {dimension_semantics = [#tpu.dimension_semantics<parallel>], iteration_bounds = array<i64: 1>, scalar_prefetch = 0 : i64, scratch_operands = 0 : i64, tpu.core_type = #tpu.core_type<tc>, window_params = [{transform_indices = @transform_0, window_bounds = array<i64: 8, 128>}, {transform_indices = @transform_1, window_bounds = array<i64: 8, 1>}, {pipeline_mode = #tpu.pipeline_mode<synchronous>, transform_indices = @transform_2, window_bounds = array<i64: 2432, 64>}, {pipeline_mode = #tpu.pipeline_mode<synchronous>, transform_indices = @transform_3, window_bounds = array<i64: 64, 64>}, {pipeline_mode = #tpu.pipeline_mode<synchronous>, transform_indices = @transform_4, window_bounds = array<i64: 1, 64>}, {pipeline_mode = #tpu.pipeline_mode<synchronous>, transform_indices = @transform_5, window_bounds = array<i64: 128, 64>}, {pipeline_mode = #tpu.pipeline_mode<synchronous>, transform_indices = @transform_6, window_bounds = array<i64: 64, 64>}, {pipeline_mode = #tpu.pipeline_mode<synchronous>, transform_indices = @transform_7, window_bounds = array<i64: 1, 64>}, {pipeline_mode = #tpu.pipeline_mode<synchronous>, transform_indices = @transform_8, window_bounds = array<i64: 64, 64>}, {pipeline_mode = #tpu.pipeline_mode<synchronous>, transform_indices = @transform_9, window_bounds = array<i64: 1, 64>}, {transform_indices = @transform_10, window_bounds = array<i64: 8, 128>}]} {
    %c0 = arith.constant 0 : index
    %c0_0 = arith.constant 0 : index
    %0 = vector.load %arg2[%c0, %c0_0] : memref<8x1xi32, #tpu.memory_space<vmem>>, vector<8x1xi32>
    %1 = tpu.iota {dimensions = array<i32: 1>} : vector<8x2432xi32>
    %2 = vector.broadcast %0 : vector<8x1xi32> to vector<8x2432xi32>
    %3 = arith.cmpi eq, %1, %2 : vector<8x2432xi32>
    %4 = arith.extui %3 : vector<8x2432xi1> to vector<8x2432xi32>
    %5 = arith.sitofp %4 : vector<8x2432xi32> to vector<8x2432xf32>
    %c0_1 = arith.constant 0 : index
    %c0_2 = arith.constant 0 : index
    %6 = vector.load %arg3[%c0_1, %c0_2] : memref<2432x64xf32, #tpu.memory_space<vmem>>, vector<2432x64xf32>
    %cst = arith.constant dense<0.000000e+00> : vector<8x64xf32>
    %7 = tpu.matmul %5, %6, %cst {dimension_numbers = #tpu.dot_dimension_numbers<[1], [0], [0], [1], [0, 0, 1, 1], [], []>} : vector<8x2432xf32>, vector<2432x64xf32>, vector<8x64xf32> -> vector<8x64xf32>
    %c0_3 = arith.constant 0 : index
    %c0_4 = arith.constant 0 : index
    %8 = vector.load %arg4[%c0_3, %c0_4] : memref<64x64xf32, #tpu.memory_space<vmem>>, vector<64x64xf32>
    %cst_5 = arith.constant dense<0.000000e+00> : vector<8x64xf32>
    %9 = tpu.matmul %7, %8, %cst_5 {dimension_numbers = #tpu.dot_dimension_numbers<[1], [0], [0], [1], [0, 0, 1, 1], [], []>} : vector<8x64xf32>, vector<64x64xf32>, vector<8x64xf32> -> vector<8x64xf32>
    %c0_6 = arith.constant 0 : index
    %c0_7 = arith.constant 0 : index
    %10 = vector.load %arg5[%c0_6, %c0_7] : memref<1x64xf32, #tpu.memory_space<vmem>>, vector<1x64xf32>
    %11 = vector.broadcast %10 : vector<1x64xf32> to vector<8x64xf32>
    %12 = arith.addf %9, %11 : vector<8x64xf32>
    %cst_8 = arith.constant 0.000000e+00 : f32
    %13 = vector.broadcast %cst_8 : f32 to vector<8x64xf32>
    %14 = arith.cmpf ogt, %12, %13 : vector<8x64xf32>
    %cst_9 = arith.constant 0.00999999977 : f32
    %15 = vector.broadcast %cst_9 : f32 to vector<8x64xf32>
    %16 = arith.mulf %15, %12 : vector<8x64xf32>
    %17 = arith.select %14, %12, %16 : vector<8x64xi1>, vector<8x64xf32>
    %c0_10 = arith.constant 0 : index
    %c0_11 = arith.constant 0 : index
    %18 = vector.load %arg1[%c0_10, %c0_11] : memref<8x128xf32, #tpu.memory_space<vmem>>, vector<8x128xf32>
    %c0_12 = arith.constant 0 : index
    %c0_13 = arith.constant 0 : index
    %19 = vector.load %arg6[%c0_12, %c0_13] : memref<128x64xf32, #tpu.memory_space<vmem>>, vector<128x64xf32>
    %cst_14 = arith.constant dense<0.000000e+00> : vector<8x64xf32>
    %20 = tpu.matmul %18, %19, %cst_14 {dimension_numbers = #tpu.dot_dimension_numbers<[1], [0], [0], [1], [0, 0, 1, 1], [], []>} : vector<8x128xf32>, vector<128x64xf32>, vector<8x64xf32> -> vector<8x64xf32>
    %c0_15 = arith.constant 0 : index
    %c0_16 = arith.constant 0 : index
    %21 = vector.load %arg7[%c0_15, %c0_16] : memref<64x64xf32, #tpu.memory_space<vmem>>, vector<64x64xf32>
    %cst_17 = arith.constant dense<0.000000e+00> : vector<8x64xf32>
    %22 = tpu.matmul %17, %21, %cst_17 {dimension_numbers = #tpu.dot_dimension_numbers<[1], [0], [0], [1], [0, 0, 1, 1], [], []>} : vector<8x64xf32>, vector<64x64xf32>, vector<8x64xf32> -> vector<8x64xf32>
    %23 = arith.addf %20, %22 : vector<8x64xf32>
    %c0_18 = arith.constant 0 : index
    %c0_19 = arith.constant 0 : index
    %24 = vector.load %arg8[%c0_18, %c0_19] : memref<1x64xf32, #tpu.memory_space<vmem>>, vector<1x64xf32>
    %25 = vector.broadcast %24 : vector<1x64xf32> to vector<8x64xf32>
    %26 = arith.addf %23, %25 : vector<8x64xf32>
    %cst_20 = arith.constant 0.000000e+00 : f32
    %27 = vector.broadcast %cst_20 : f32 to vector<8x64xf32>
    %28 = arith.cmpf ogt, %26, %27 : vector<8x64xf32>
    %cst_21 = arith.constant 0.00999999977 : f32
    %29 = vector.broadcast %cst_21 : f32 to vector<8x64xf32>
    %30 = arith.mulf %29, %26 : vector<8x64xf32>
    %31 = arith.select %28, %26, %30 : vector<8x64xi1>, vector<8x64xf32>
    %c0_22 = arith.constant 0 : index
    %c0_23 = arith.constant 0 : index
    %32 = vector.load %arg9[%c0_22, %c0_23] : memref<64x64xf32, #tpu.memory_space<vmem>>, vector<64x64xf32>
    %cst_24 = arith.constant dense<0.000000e+00> : vector<8x64xf32>
    %33 = tpu.matmul %31, %32, %cst_24 {dimension_numbers = #tpu.dot_dimension_numbers<[1], [0], [0], [1], [0, 0, 1, 1], [], []>} : vector<8x64xf32>, vector<64x64xf32>, vector<8x64xf32> -> vector<8x64xf32>
    %c0_25 = arith.constant 0 : index
    %c0_26 = arith.constant 0 : index
    %34 = vector.load %arg10[%c0_25, %c0_26] : memref<1x64xf32, #tpu.memory_space<vmem>>, vector<1x64xf32>
    %35 = vector.broadcast %34 : vector<1x64xf32> to vector<8x64xf32>
    %36 = arith.addf %33, %35 : vector<8x64xf32>
    %37 = tpu.concatenate %17, %36 in 1 : vector<8x64xf32>, vector<8x64xf32> -> vector<8x128xf32>
    %c0_27 = arith.constant 0 : index
    %c0_28 = arith.constant 0 : index
    %38 = vector.load %arg11[%c0_27, %c0_28] : memref<8x128xf32, #tpu.memory_space<vmem>>, vector<8x128xf32>
    tpu.vector_store %arg11[%c0_27, %c0_28], %37 {strides = array<i32>} : memref<8x128xf32, #tpu.memory_space<vmem>>, vector<8x128xf32>,
    return
  }
  func.func @transform_0(%arg0: i32) -> (i32, i32) {
    %c0_i32 = arith.constant 0 : i32
    %c0_i32_0 = arith.constant 0 : i32
    return %arg0, %c0_i32 : i32, i32
  }
  func.func @transform_1(%arg0: i32) -> (i32, i32) {
    %c0_i32 = arith.constant 0 : i32
    %c0_i32_0 = arith.constant 0 : i32
    return %arg0, %c0_i32 : i32, i32
  }
  func.func @transform_2(%arg0: i32) -> (i32, i32) {
    %c0_i32 = arith.constant 0 : i32
    %c0_i32_0 = arith.constant 0 : i32
    %c0_i32_1 = arith.constant 0 : i32
    return %c0_i32, %c0_i32_0 : i32, i32
  }
  func.func @transform_3(%arg0: i32) -> (i32, i32) {
    %c0_i32 = arith.constant 0 : i32
    %c0_i32_0 = arith.constant 0 : i32
    %c0_i32_1 = arith.constant 0 : i32
    return %c0_i32, %c0_i32_0 : i32, i32
  }
  func.func @transform_4(%arg0: i32) -> (i32, i32) {
    %c0_i32 = arith.constant 0 : i32
    %c0_i32_0 = arith.constant 0 : i32
    %c0_i32_1 = arith.constant 0 : i32
    return %c0_i32, %c0_i32_0 : i32, i32
  }
  func.func @transform_5(%arg0: i32) -> (i32, i32) {
    %c0_i32 = arith.constant 0 : i32
    %c0_i32_0 = arith.constant 0 : i32
    %c0_i32_1 = arith.constant 0 : i32
    return %c0_i32, %c0_i32_0 : i32, i32
  }
  func.func @transform_6(%arg0: i32) -> (i32, i32) {
    %c0_i32 = arith.constant 0 : i32
    %c0_i32_0 = arith.constant 0 : i32
    %c0_i32_1 = arith.constant 0 : i32
    return %c0_i32, %c0_i32_0 : i32, i32
  }
  func.func @transform_7(%arg0: i32) -> (i32, i32) {
    %c0_i32 = arith.constant 0 : i32
    %c0_i32_0 = arith.constant 0 : i32
    %c0_i32_1 = arith.constant 0 : i32
    return %c0_i32, %c0_i32_0 : i32, i32
  }
  func.func @transform_8(%arg0: i32) -> (i32, i32) {
    %c0_i32 = arith.constant 0 : i32
    %c0_i32_0 = arith.constant 0 : i32
    %c0_i32_1 = arith.constant 0 : i32
    return %c0_i32, %c0_i32_0 : i32, i32
  }
  func.func @transform_9(%arg0: i32) -> (i32, i32) {
    %c0_i32 = arith.constant 0 : i32
    %c0_i32_0 = arith.constant 0 : i32
    %c0_i32_1 = arith.constant 0 : i32
    return %c0_i32, %c0_i32_0 : i32, i32
  }
  func.func @transform_10(%arg0: i32) -> (i32, i32) {
    %c0_i32 = arith.constant 0 : i32
    %c0_i32_0 = arith.constant 0 : i32
    return %arg0, %c0_i32 : i32, i32
  }
}

</mosaic_0001>

<llo_original>
// kernel: tpu_custom_call.1
$region0: #{tpu_custom_call.1}
  #allocation0 [shape = 'u32[]', space=smem, size = 0x4, offset = 0x4, fixed_abs, tag = 'smem constant byte address 0x4 - core index']
  #allocation1 [shape = 'u32[144,128]{1,0:T(1,128)}', space=vmem, size = 0x12000, scoped, tag = 'internal scratch']
  %s0 = inlined_call_operand.vmem [shape: f32[8,128], index: 0, kind: input, shape index: {}]
  %s1 = inlined_call_operand.vmem [shape: s32[8,1], index: 1, kind: input, shape index: {}]
  %s2 = inlined_call_operand.vmem [shape: f32[2432,64], index: 2, kind: input, shape index: {}]
  %s3 = inlined_call_operand.vmem [shape: f32[64,64], index: 3, kind: input, shape index: {}]
  %s4 = inlined_call_operand.vmem [shape: f32[1,64], index: 4, kind: input, shape index: {}]
  %s5 = inlined_call_operand.vmem [shape: f32[128,64], index: 5, kind: input, shape index: {}]
  %s6 = inlined_call_operand.vmem [shape: f32[64,64], index: 6, kind: input, shape index: {}]
  %s7 = inlined_call_operand.vmem [shape: f32[1,64], index: 7, kind: input, shape index: {}]
  %s8 = inlined_call_operand.vmem [shape: f32[64,64], index: 8, kind: input, shape index: {}]
  %s9 = inlined_call_operand.vmem [shape: f32[1,64], index: 9, kind: input, shape index: {}]
  %s10 = inlined_call_operand.hbm [shape: f32[8,128], index: 10, kind: output, shape index: {}]
  %s11 = sld [smem:[#allocation0]]
  $region50: #{tpu_custom_call.1} parent=0
    _
  %s13 = ssub.s32 1, %s11
  %s14 = scalar_select 0, %s13, %s11
  $region1: #{tpu_custom_call.1} parent=0
    #allocation2 [shape = 'u8[4096]{0}', space=vmem, size = 0x1000, scoped, tag = 'output window, operand 0, single buffered']
    #allocation3 [shape = 's32[1]{0}', space=sflag, size = 0x4, scoped, tag = 'scoped memory for tpu_custom_call.1']
    %15 = vsyncpa [#allocation3], 0
    // Predicated region
    $region2: #{tpu_custom_call.1} parent=1 // pred_check
      _
    $region3: #{tpu_custom_call.1} parent=1 // pred_check_branch
      %17 = sbr.rel (0) target = $region5
    $region4: #{tpu_custom_call.1} parent=1 // pred_region
      _
    $region5: #{tpu_custom_call.1} parent=1 // pred_fallthru
      _
    // Predicated region
    $region6: #{tpu_custom_call.1} parent=1 // pred_check
      _
    $region7: #{tpu_custom_call.1} parent=1 // pred_check_branch
      %19 = sbr.rel (0) target = $region9
    $region8: #{tpu_custom_call.1} parent=1 // pred_region
      _
    $region9: #{tpu_custom_call.1} parent=1 // pred_fallthru
      _
    // Predicated region
    $region10: #{tpu_custom_call.1} parent=1 // pred_check
      _
    $region11: #{tpu_custom_call.1} parent=1 // pred_check_branch
      %21 = sbr.rel (0) target = $region13
    $region12: #{tpu_custom_call.1} parent=1 // pred_region
      _
    $region13: #{tpu_custom_call.1} parent=1 // pred_fallthru
      _
    // Predicated region
    $region14: #{tpu_custom_call.1} parent=1 // pred_check
      _
    $region15: #{tpu_custom_call.1} parent=1 // pred_check_branch
      %23 = sbr.rel (0) target = $region17
    $region16: #{tpu_custom_call.1} parent=1 // pred_region
      _
    $region17: #{tpu_custom_call.1} parent=1 // pred_fallthru
      _
    // Predicated region
    $region18: #{tpu_custom_call.1} parent=1 // pred_check
      _
    $region19: #{tpu_custom_call.1} parent=1 // pred_check_branch
      %25 = sbr.rel (0) target = $region21
    $region20: #{tpu_custom_call.1} parent=1 // pred_region
      _
    $region21: #{tpu_custom_call.1} parent=1 // pred_fallthru
      _
    // Predicated region
    $region22: #{tpu_custom_call.1} parent=1 // pred_check
      _
    $region23: #{tpu_custom_call.1} parent=1 // pred_check_branch
      %27 = sbr.rel (0) target = $region25
    $region24: #{tpu_custom_call.1} parent=1 // pred_region
      _
    $region25: #{tpu_custom_call.1} parent=1 // pred_fallthru
      _
    // Predicated region
    $region26: #{tpu_custom_call.1} parent=1 // pred_check
      _
    $region27: #{tpu_custom_call.1} parent=1 // pred_check_branch
      %29 = sbr.rel (0) target = $region29
    $region28: #{tpu_custom_call.1} parent=1 // pred_region
      _
    $region29: #{tpu_custom_call.1} parent=1 // pred_fallthru
      _
    // Predicated region
    $region30: #{tpu_custom_call.1} parent=1 // pred_check
      _
    $region31: #{tpu_custom_call.1} parent=1 // pred_check_branch
      %31 = sbr.rel (0) target = $region33
    $region32: #{tpu_custom_call.1} parent=1 // pred_region
      _
    $region33: #{tpu_custom_call.1} parent=1 // pred_fallthru
      _
    // Predicated region
    $region34: #{tpu_custom_call.1} parent=1 // pred_check
      _
    $region35: #{tpu_custom_call.1} parent=1 // pred_check_branch
      %33 = sbr.rel (0) target = $region37
    $region36: #{tpu_custom_call.1} parent=1 // pred_region
      _
    $region37: #{tpu_custom_call.1} parent=1 // pred_fallthru
      _
    // Predicated region
    $region38: #{tpu_custom_call.1} parent=1 // pred_check
      _
    $region39: #{tpu_custom_call.1} parent=1 // pred_check_branch
      %35 = sbr.rel (0) target = $region41
    $region40: #{tpu_custom_call.1} parent=1 // pred_region
      _
    $region41: #{tpu_custom_call.1} parent=1 // pred_fallthru
      _
    %v36 = vld [vmem:[%s1] sm:$0xff]
    %v37 = vlaneseq
    %v38 = vand.u32 %v37, 127
    %v39 = vadd.s32 %v38, 128
    %v40 = vadd.s32 %v38, 256
    %v41 = vadd.s32 %v38, 384
    %v42 = vadd.s32 %v38, 512
    %v43 = vadd.s32 %v38, 640
    %v44 = vadd.s32 %v38, 768
    %v45 = vadd.s32 %v38, 896
    %v46 = vadd.s32 %v38, 1024
    %v47 = vadd.s32 %v38, 1152
    %v48 = vadd.s32 %v38, 1280
    %v49 = vadd.s32 %v38, 1408
    %v50 = vadd.s32 %v38, 1536
    %v51 = vadd.s32 %v38, 1664
    %v52 = vadd.s32 %v38, 1792
    %v53 = vadd.s32 %v38, 1920
    %v54 = vadd.s32 %v38, 2048
    %v55 = vadd.s32 %v38, 2176
    %v56 = vadd.s32 %v38, 2304
    %57 = vset.pattern.permute.xlu0 0
    %58 = vperm.xlu0 %57, %v36
    %v59 = vpop.permute.xlu0 %58
    %vm60 = vcmp.eq.s32.totalorder %v38, %v59
    %vm61 = vcmp.eq.s32.totalorder %v39, %v59
    %vm62 = vcmp.eq.s32.totalorder %v40, %v59
    %vm63 = vcmp.eq.s32.totalorder %v41, %v59
    %vm64 = vcmp.eq.s32.totalorder %v42, %v59
    %vm65 = vcmp.eq.s32.totalorder %v43, %v59
    %vm66 = vcmp.eq.s32.totalorder %v44, %v59
    %vm67 = vcmp.eq.s32.totalorder %v45, %v59
    %vm68 = vcmp.eq.s32.totalorder %v46, %v59
    %vm69 = vcmp.eq.s32.totalorder %v47, %v59
    %vm70 = vcmp.eq.s32.totalorder %v48, %v59
    %vm71 = vcmp.eq.s32.totalorder %v49, %v59
    %vm72 = vcmp.eq.s32.totalorder %v50, %v59
    %vm73 = vcmp.eq.s32.totalorder %v51, %v59
    %vm74 = vcmp.eq.s32.totalorder %v52, %v59
    %vm75 = vcmp.eq.s32.totalorder %v53, %v59
    %vm76 = vcmp.eq.s32.totalorder %v54, %v59
    %vm77 = vcmp.eq.s32.totalorder %v55, %v59
    %vm78 = vcmp.eq.s32.totalorder %v56, %v59
    %v79 = vsel %vm60, 1, 0
    %v80 = vsel %vm61, 1, 0
    %v81 = vsel %vm62, 1, 0
    %v82 = vsel %vm63, 1, 0
    %v83 = vsel %vm64, 1, 0
    %v84 = vsel %vm65, 1, 0
    %v85 = vsel %vm66, 1, 0
    %v86 = vsel %vm67, 1, 0
    %v87 = vsel %vm68, 1, 0
    %v88 = vsel %vm69, 1, 0
    %v89 = vsel %vm70, 1, 0
    %v90 = vsel %vm71, 1, 0
    %v91 = vsel %vm72, 1, 0
    %v92 = vsel %vm73, 1, 0
    %v93 = vsel %vm74, 1, 0
    %v94 = vsel %vm75, 1, 0
    %v95 = vsel %vm76, 1, 0
    %v96 = vsel %vm77, 1, 0
    %v97 = vsel %vm78, 1, 0
    %v98 = vcvt.s32.f32 %v79
    %v99 = vcvt.s32.f32 %v80
    %v100 = vcvt.s32.f32 %v81
    %v101 = vcvt.s32.f32 %v82
    %v102 = vcvt.s32.f32 %v83
    %v103 = vcvt.s32.f32 %v84
    %v104 = vcvt.s32.f32 %v85
    %v105 = vcvt.s32.f32 %v86
    %v106 = vcvt.s32.f32 %v87
    %v107 = vcvt.s32.f32 %v88
    %v108 = vcvt.s32.f32 %v89
    %v109 = vcvt.s32.f32 %v90
    %v110 = vcvt.s32.f32 %v91
    %v111 = vcvt.s32.f32 %v92
    %v112 = vcvt.s32.f32 %v93
    %v113 = vcvt.s32.f32 %v94
    %v114 = vcvt.s32.f32 %v95
    %v115 = vcvt.s32.f32 %v96
    %v116 = vcvt.s32.f32 %v97
    %v117 = vld [vmem:[%s2] sm:$0xff]
    %v118 = vld [vmem:[%s2 + $0x8] sm:$0xff]
    %v119 = vld [vmem:[%s2 + $0x10] sm:$0xff]
    %v120 = vld [vmem:[%s2 + $0x18] sm:$0xff]
    %v121 = vld [vmem:[%s2 + $0x20] sm:$0xff]
    %v122 = vld [vmem:[%s2 + $0x28] sm:$0xff]
    %v123 = vld [vmem:[%s2 + $0x30] sm:$0xff]
    %v124 = vld [vmem:[%s2 + $0x38] sm:$0xff]
    %v125 = vld [vmem:[%s2 + $0x40] sm:$0xff]
    %v126 = vld [vmem:[%s2 + $0x48] sm:$0xff]
    %v127 = vld [vmem:[%s2 + $0x50] sm:$0xff]
    %v128 = vld [vmem:[%s2 + $0x58] sm:$0xff]
    %v129 = vld [vmem:[%s2 + $0x60] sm:$0xff]
    %v130 = vld [vmem:[%s2 + $0x68] sm:$0xff]
    %v131 = vld [vmem:[%s2 + $0x70] sm:$0xff]
    %v132 = vld [vmem:[%s2 + $0x78] sm:$0xff]
    %v133 = vld [vmem:[%s2 + $0x80] sm:$0xff]
    %v134 = vld [vmem:[%s2 + $0x88] sm:$0xff]
    %v135 = vld [vmem:[%s2 + $0x90] sm:$0xff]
    %v136 = vld [vmem:[%s2 + $0x98] sm:$0xff]
    %v137 = vld [vmem:[%s2 + $0xa0] sm:$0xff]
    %v138 = vld [vmem:[%s2 + $0xa8] sm:$0xff]
    %v139 = vld [vmem:[%s2 + $0xb0] sm:$0xff]
    %v140 = vld [vmem:[%s2 + $0xb8] sm:$0xff]
    %v141 = vld [vmem:[%s2 + $0xc0] sm:$0xff]
    %v142 = vld [vmem:[%s2 + $0xc8] sm:$0xff]
    %v143 = vld [vmem:[%s2 + $0xd0] sm:$0xff]
    %v144 = vld [vmem:[%s2 + $0xd8] sm:$0xff]
    %v145 = vld [vmem:[%s2 + $0xe0] sm:$0xff]
    %v146 = vld [vmem:[%s2 + $0xe8] sm:$0xff]
    %v147 = vld [vmem:[%s2 + $0xf0] sm:$0xff]
    %v148 = vld [vmem:[%s2 + $0xf8] sm:$0xff]
    %v149 = vld [vmem:[%s2 + $0x100] sm:$0xff]
    %v150 = vld [vmem:[%s2 + $0x108] sm:$0xff]
    %v151 = vld [vmem:[%s2 + $0x110] sm:$0xff]
    %v152 = vld [vmem:[%s2 + $0x118] sm:$0xff]
    %v153 = vld [vmem:[%s2 + $0x120] sm:$0xff]
    %v154 = vld [vmem:[%s2 + $0x128] sm:$0xff]
    %v155 = vld [vmem:[%s2 + $0x130] sm:$0xff]
    %v156 = vld [vmem:[%s2 + $0x138] sm:$0xff]
    %v157 = vld [vmem:[%s2 + $0x140] sm:$0xff]
    %v158 = vld [vmem:[%s2 + $0x148] sm:$0xff]
    %v159 = vld [vmem:[%s2 + $0x150] sm:$0xff]
    %v160 = vld [vmem:[%s2 + $0x158] sm:$0xff]
    %v161 = vld [vmem:[%s2 + $0x160] sm:$0xff]
    %v162 = vld [vmem:[%s2 + $0x168] sm:$0xff]
    %v163 = vld [vmem:[%s2 + $0x170] sm:$0xff]
    %v164 = vld [vmem:[%s2 + $0x178] sm:$0xff]
    %v165 = vld [vmem:[%s2 + $0x180] sm:$0xff]
    %v166 = vld [vmem:[%s2 + $0x188] sm:$0xff]
    %v167 = vld [vmem:[%s2 + $0x190] sm:$0xff]
    %v168 = vld [vmem:[%s2 + $0x198] sm:$0xff]
    %v169 = vld [vmem:[%s2 + $0x1a0] sm:$0xff]
    %v170 = vld [vmem:[%s2 + $0x1a8] sm:$0xff]
    %v171 = vld [vmem:[%s2 + $0x1b0] sm:$0xff]
    %v172 = vld [vmem:[%s2 + $0x1b8] sm:$0xff]
    %v173 = vld [vmem:[%s2 + $0x1c0] sm:$0xff]
    %v174 = vld [vmem:[%s2 + $0x1c8] sm:$0xff]
    %v175 = vld [vmem:[%s2 + $0x1d0] sm:$0xff]
    %v176 = vld [vmem:[%s2 + $0x1d8] sm:$0xff]
    %v177 = vld [vmem:[%s2 + $0x1e0] sm:$0xff]
    %v178 = vld [vmem:[%s2 + $0x1e8] sm:$0xff]
    %v179 = vld [vmem:[%s2 + $0x1f0] sm:$0xff]
    %v180 = vld [vmem:[%s2 + $0x1f8] sm:$0xff]
    %v181 = vld [vmem:[%s2 + $0x200] sm:$0xff]
    %v182 = vld [vmem:[%s2 + $0x208] sm:$0xff]
    %v183 = vld [vmem:[%s2 + $0x210] sm:$0xff]
    %v184 = vld [vmem:[%s2 + $0x218] sm:$0xff]
    %v185 = vld [vmem:[%s2 + $0x220] sm:$0xff]
    %v186 = vld [vmem:[%s2 + $0x228] sm:$0xff]
    %v187 = vld [vmem:[%s2 + $0x230] sm:$0xff]
    %v188 = vld [vmem:[%s2 + $0x238] sm:$0xff]
    %v189 = vld [vmem:[%s2 + $0x240] sm:$0xff]
    %v190 = vld [vmem:[%s2 + $0x248] sm:$0xff]
    %v191 = vld [vmem:[%s2 + $0x250] sm:$0xff]
    %v192 = vld [vmem:[%s2 + $0x258] sm:$0xff]
    %v193 = vld [vmem:[%s2 + $0x260] sm:$0xff]
    %v194 = vld [vmem:[%s2 + $0x268] sm:$0xff]
    %v195 = vld [vmem:[%s2 + $0x270] sm:$0xff]
    %v196 = vld [vmem:[%s2 + $0x278] sm:$0xff]
    %v197 = vld [vmem:[%s2 + $0x280] sm:$0xff]
    %v198 = vld [vmem:[%s2 + $0x288] sm:$0xff]
    %v199 = vld [vmem:[%s2 + $0x290] sm:$0xff]
    %v200 = vld [vmem:[%s2 + $0x298] sm:$0xff]
    %v201 = vld [vmem:[%s2 + $0x2a0] sm:$0xff]
    %v202 = vld [vmem:[%s2 + $0x2a8] sm:$0xff]
    %v203 = vld [vmem:[%s2 + $0x2b0] sm:$0xff]
    %v204 = vld [vmem:[%s2 + $0x2b8] sm:$0xff]
    %v205 = vld [vmem:[%s2 + $0x2c0] sm:$0xff]
    %v206 = vld [vmem:[%s2 + $0x2c8] sm:$0xff]
    %v207 = vld [vmem:[%s2 + $0x2d0] sm:$0xff]
    %v208 = vld [vmem:[%s2 + $0x2d8] sm:$0xff]
    %v209 = vld [vmem:[%s2 + $0x2e0] sm:$0xff]
    %v210 = vld [vmem:[%s2 + $0x2e8] sm:$0xff]
    %v211 = vld [vmem:[%s2 + $0x2f0] sm:$0xff]
    %v212 = vld [vmem:[%s2 + $0x2f8] sm:$0xff]
    %v213 = vld [vmem:[%s2 + $0x300] sm:$0xff]
    %v214 = vld [vmem:[%s2 + $0x308] sm:$0xff]
    %v215 = vld [vmem:[%s2 + $0x310] sm:$0xff]
    %v216 = vld [vmem:[%s2 + $0x318] sm:$0xff]
    %v217 = vld [vmem:[%s2 + $0x320] sm:$0xff]
    %v218 = vld [vmem:[%s2 + $0x328] sm:$0xff]
    %v219 = vld [vmem:[%s2 + $0x330] sm:$0xff]
    %v220 = vld [vmem:[%s2 + $0x338] sm:$0xff]
    %v221 = vld [vmem:[%s2 + $0x340] sm:$0xff]
    %v222 = vld [vmem:[%s2 + $0x348] sm:$0xff]
    %v223 = vld [vmem:[%s2 + $0x350] sm:$0xff]
    %v224 = vld [vmem:[%s2 + $0x358] sm:$0xff]
    %v225 = vld [vmem:[%s2 + $0x360] sm:$0xff]
    %v226 = vld [vmem:[%s2 + $0x368] sm:$0xff]
    %v227 = vld [vmem:[%s2 + $0x370] sm:$0xff]
    %v228 = vld [vmem:[%s2 + $0x378] sm:$0xff]
    %v229 = vld [vmem:[%s2 + $0x380] sm:$0xff]
    %v230 = vld [vmem:[%s2 + $0x388] sm:$0xff]
    %v231 = vld [vmem:[%s2 + $0x390] sm:$0xff]
    %v232 = vld [vmem:[%s2 + $0x398] sm:$0xff]
    %v233 = vld [vmem:[%s2 + $0x3a0] sm:$0xff]
    %v234 = vld [vmem:[%s2 + $0x3a8] sm:$0xff]
    %v235 = vld [vmem:[%s2 + $0x3b0] sm:$0xff]
    %v236 = vld [vmem:[%s2 + $0x3b8] sm:$0xff]
    %v237 = vld [vmem:[%s2 + $0x3c0] sm:$0xff]
    %v238 = vld [vmem:[%s2 + $0x3c8] sm:$0xff]
    %v239 = vld [vmem:[%s2 + $0x3d0] sm:$0xff]
    %v240 = vld [vmem:[%s2 + $0x3d8] sm:$0xff]
    %v241 = vld [vmem:[%s2 + $0x3e0] sm:$0xff]
    %v242 = vld [vmem:[%s2 + $0x3e8] sm:$0xff]
    %v243 = vld [vmem:[%s2 + $0x3f0] sm:$0xff]
    %v244 = vld [vmem:[%s2 + $0x3f8] sm:$0xff]
    %v245 = vld [vmem:[%s2 + $0x400] sm:$0xff]
    %v246 = vld [vmem:[%s2 + $0x408] sm:$0xff]
    %v247 = vld [vmem:[%s2 + $0x410] sm:$0xff]
    %v248 = vld [vmem:[%s2 + $0x418] sm:$0xff]
    %v249 = vld [vmem:[%s2 + $0x420] sm:$0xff]
    %v250 = vld [vmem:[%s2 + $0x428] sm:$0xff]
    %v251 = vld [vmem:[%s2 + $0x430] sm:$0xff]
    %v252 = vld [vmem:[%s2 + $0x438] sm:$0xff]
    %v253 = vld [vmem:[%s2 + $0x440] sm:$0xff]
    %v254 = vld [vmem:[%s2 + $0x448] sm:$0xff]
    %v255 = vld [vmem:[%s2 + $0x450] sm:$0xff]
    %v256 = vld [vmem:[%s2 + $0x458] sm:$0xff]
    %v257 = vld [vmem:[%s2 + $0x460] sm:$0xff]
    %v258 = vld [vmem:[%s2 + $0x468] sm:$0xff]
    %v259 = vld [vmem:[%s2 + $0x470] sm:$0xff]
    %v260 = vld [vmem:[%s2 + $0x478] sm:$0xff]
    %v261 = vld [vmem:[%s2 + $0x480] sm:$0xff]
    %v262 = vld [vmem:[%s2 + $0x488] sm:$0xff]
    %v263 = vld [vmem:[%s2 + $0x490] sm:$0xff]
    %v264 = vld [vmem:[%s2 + $0x498] sm:$0xff]
    %v265 = vld [vmem:[%s2 + $0x4a0] sm:$0xff]
    %v266 = vld [vmem:[%s2 + $0x4a8] sm:$0xff]
    %v267 = vld [vmem:[%s2 + $0x4b0] sm:$0xff]
    %v268 = vld [vmem:[%s2 + $0x4b8] sm:$0xff]
    %v269 = vld [vmem:[%s2 + $0x4c0] sm:$0xff]
    %v270 = vld [vmem:[%s2 + $0x4c8] sm:$0xff]
    %v271 = vld [vmem:[%s2 + $0x4d0] sm:$0xff]
    %v272 = vld [vmem:[%s2 + $0x4d8] sm:$0xff]
    %v273 = vld [vmem:[%s2 + $0x4e0] sm:$0xff]
    %v274 = vld [vmem:[%s2 + $0x4e8] sm:$0xff]
    %v275 = vld [vmem:[%s2 + $0x4f0] sm:$0xff]
    %v276 = vld [vmem:[%s2 + $0x4f8] sm:$0xff]
    %v277 = vld [vmem:[%s2 + $0x500] sm:$0xff]
    %v278 = vld [vmem:[%s2 + $0x508] sm:$0xff]
    %v279 = vld [vmem:[%s2 + $0x510] sm:$0xff]
    %v280 = vld [vmem:[%s2 + $0x518] sm:$0xff]
    %v281 = vld [vmem:[%s2 + $0x520] sm:$0xff]
    %v282 = vld [vmem:[%s2 + $0x528] sm:$0xff]
    %v283 = vld [vmem:[%s2 + $0x530] sm:$0xff]
    %v284 = vld [vmem:[%s2 + $0x538] sm:$0xff]
    %v285 = vld [vmem:[%s2 + $0x540] sm:$0xff]
    %v286 = vld [vmem:[%s2 + $0x548] sm:$0xff]
    %v287 = vld [vmem:[%s2 + $0x550] sm:$0xff]
    %v288 = vld [vmem:[%s2 + $0x558] sm:$0xff]
    %v289 = vld [vmem:[%s2 + $0x560] sm:$0xff]
    %v290 = vld [vmem:[%s2 + $0x568] sm:$0xff]
    %v291 = vld [vmem:[%s2 + $0x570] sm:$0xff]
    %v292 = vld [vmem:[%s2 + $0x578] sm:$0xff]
    %v293 = vld [vmem:[%s2 + $0x580] sm:$0xff]
    %v294 = vld [vmem:[%s2 + $0x588] sm:$0xff]
    %v295 = vld [vmem:[%s2 + $0x590] sm:$0xff]
    %v296 = vld [vmem:[%s2 + $0x598] sm:$0xff]
    %v297 = vld [vmem:[%s2 + $0x5a0] sm:$0xff]
    %v298 = vld [vmem:[%s2 + $0x5a8] sm:$0xff]
    %v299 = vld [vmem:[%s2 + $0x5b0] sm:$0xff]
    %v300 = vld [vmem:[%s2 + $0x5b8] sm:$0xff]
    %v301 = vld [vmem:[%s2 + $0x5c0] sm:$0xff]
    %v302 = vld [vmem:[%s2 + $0x5c8] sm:$0xff]
    %v303 = vld [vmem:[%s2 + $0x5d0] sm:$0xff]
    %v304 = vld [vmem:[%s2 + $0x5d8] sm:$0xff]
    %v305 = vld [vmem:[%s2 + $0x5e0] sm:$0xff]
    %v306 = vld [vmem:[%s2 + $0x5e8] sm:$0xff]
    %v307 = vld [vmem:[%s2 + $0x5f0] sm:$0xff]
    %v308 = vld [vmem:[%s2 + $0x5f8] sm:$0xff]
    %v309 = vld [vmem:[%s2 + $0x600] sm:$0xff]
    %v310 = vld [vmem:[%s2 + $0x608] sm:$0xff]
    %v311 = vld [vmem:[%s2 + $0x610] sm:$0xff]
    %v312 = vld [vmem:[%s2 + $0x618] sm:$0xff]
    %v313 = vld [vmem:[%s2 + $0x620] sm:$0xff]
    %v314 = vld [vmem:[%s2 + $0x628] sm:$0xff]
    %v315 = vld [vmem:[%s2 + $0x630] sm:$0xff]
    %v316 = vld [vmem:[%s2 + $0x638] sm:$0xff]
    %v317 = vld [vmem:[%s2 + $0x640] sm:$0xff]
    %v318 = vld [vmem:[%s2 + $0x648] sm:$0xff]
    %v319 = vld [vmem:[%s2 + $0x650] sm:$0xff]
    %v320 = vld [vmem:[%s2 + $0x658] sm:$0xff]
    %v321 = vld [vmem:[%s2 + $0x660] sm:$0xff]
    %v322 = vld [vmem:[%s2 + $0x668] sm:$0xff]
    %v323 = vld [vmem:[%s2 + $0x670] sm:$0xff]
    %v324 = vld [vmem:[%s2 + $0x678] sm:$0xff]
    %v325 = vld [vmem:[%s2 + $0x680] sm:$0xff]
    %v326 = vld [vmem:[%s2 + $0x688] sm:$0xff]
    %v327 = vld [vmem:[%s2 + $0x690] sm:$0xff]
    %v328 = vld [vmem:[%s2 + $0x698] sm:$0xff]
    %v329 = vld [vmem:[%s2 + $0x6a0] sm:$0xff]
    %v330 = vld [vmem:[%s2 + $0x6a8] sm:$0xff]
    %v331 = vld [vmem:[%s2 + $0x6b0] sm:$0xff]
    %v332 = vld [vmem:[%s2 + $0x6b8] sm:$0xff]
    %v333 = vld [vmem:[%s2 + $0x6c0] sm:$0xff]
    %v334 = vld [vmem:[%s2 + $0x6c8] sm:$0xff]
    %v335 = vld [vmem:[%s2 + $0x6d0] sm:$0xff]
    %v336 = vld [vmem:[%s2 + $0x6d8] sm:$0xff]
    %v337 = vld [vmem:[%s2 + $0x6e0] sm:$0xff]
    %v338 = vld [vmem:[%s2 + $0x6e8] sm:$0xff]
    %v339 = vld [vmem:[%s2 + $0x6f0] sm:$0xff]
    %v340 = vld [vmem:[%s2 + $0x6f8] sm:$0xff]
    %v341 = vld [vmem:[%s2 + $0x700] sm:$0xff]
    %v342 = vld [vmem:[%s2 + $0x708] sm:$0xff]
    %v343 = vld [vmem:[%s2 + $0x710] sm:$0xff]
    %v344 = vld [vmem:[%s2 + $0x718] sm:$0xff]
    %v345 = vld [vmem:[%s2 + $0x720] sm:$0xff]
    %v346 = vld [vmem:[%s2 + $0x728] sm:$0xff]
    %v347 = vld [vmem:[%s2 + $0x730] sm:$0xff]
    %v348 = vld [vmem:[%s2 + $0x738] sm:$0xff]
    %v349 = vld [vmem:[%s2 + $0x740] sm:$0xff]
    %v350 = vld [vmem:[%s2 + $0x748] sm:$0xff]
    %v351 = vld [vmem:[%s2 + $0x750] sm:$0xff]
    %v352 = vld [vmem:[%s2 + $0x758] sm:$0xff]
    %v353 = vld [vmem:[%s2 + $0x760] sm:$0xff]
    %v354 = vld [vmem:[%s2 + $0x768] sm:$0xff]
    %v355 = vld [vmem:[%s2 + $0x770] sm:$0xff]
    %v356 = vld [vmem:[%s2 + $0x778] sm:$0xff]
    %v357 = vld [vmem:[%s2 + $0x780] sm:$0xff]
    %v358 = vld [vmem:[%s2 + $0x788] sm:$0xff]
    %v359 = vld [vmem:[%s2 + $0x790] sm:$0xff]
    %v360 = vld [vmem:[%s2 + $0x798] sm:$0xff]
    %v361 = vld [vmem:[%s2 + $0x7a0] sm:$0xff]
    %v362 = vld [vmem:[%s2 + $0x7a8] sm:$0xff]
    %v363 = vld [vmem:[%s2 + $0x7b0] sm:$0xff]
    %v364 = vld [vmem:[%s2 + $0x7b8] sm:$0xff]
    %v365 = vld [vmem:[%s2 + $0x7c0] sm:$0xff]
    %v366 = vld [vmem:[%s2 + $0x7c8] sm:$0xff]
    %v367 = vld [vmem:[%s2 + $0x7d0] sm:$0xff]
    %v368 = vld [vmem:[%s2 + $0x7d8] sm:$0xff]
    %v369 = vld [vmem:[%s2 + $0x7e0] sm:$0xff]
    %v370 = vld [vmem:[%s2 + $0x7e8] sm:$0xff]
    %v371 = vld [vmem:[%s2 + $0x7f0] sm:$0xff]
    %v372 = vld [vmem:[%s2 + $0x7f8] sm:$0xff]
    %v373 = vld [vmem:[%s2 + $0x800] sm:$0xff]
    %v374 = vld [vmem:[%s2 + $0x808] sm:$0xff]
    %v375 = vld [vmem:[%s2 + $0x810] sm:$0xff]
    %v376 = vld [vmem:[%s2 + $0x818] sm:$0xff]
    %v377 = vld [vmem:[%s2 + $0x820] sm:$0xff]
    %v378 = vld [vmem:[%s2 + $0x828] sm:$0xff]
    %v379 = vld [vmem:[%s2 + $0x830] sm:$0xff]
    %v380 = vld [vmem:[%s2 + $0x838] sm:$0xff]
    %v381 = vld [vmem:[%s2 + $0x840] sm:$0xff]
    %v382 = vld [vmem:[%s2 + $0x848] sm:$0xff]
    %v383 = vld [vmem:[%s2 + $0x850] sm:$0xff]
    %v384 = vld [vmem:[%s2 + $0x858] sm:$0xff]
    %v385 = vld [vmem:[%s2 + $0x860] sm:$0xff]
    %v386 = vld [vmem:[%s2 + $0x868] sm:$0xff]
    %v387 = vld [vmem:[%s2 + $0x870] sm:$0xff]
    %v388 = vld [vmem:[%s2 + $0x878] sm:$0xff]
    %v389 = vld [vmem:[%s2 + $0x880] sm:$0xff]
    %v390 = vld [vmem:[%s2 + $0x888] sm:$0xff]
    %v391 = vld [vmem:[%s2 + $0x890] sm:$0xff]
    %v392 = vld [vmem:[%s2 + $0x898] sm:$0xff]
    %v393 = vld [vmem:[%s2 + $0x8a0] sm:$0xff]
    %v394 = vld [vmem:[%s2 + $0x8a8] sm:$0xff]
    %v395 = vld [vmem:[%s2 + $0x8b0] sm:$0xff]
    %v396 = vld [vmem:[%s2 + $0x8b8] sm:$0xff]
    %v397 = vld [vmem:[%s2 + $0x8c0] sm:$0xff]
    %v398 = vld [vmem:[%s2 + $0x8c8] sm:$0xff]
    %v399 = vld [vmem:[%s2 + $0x8d0] sm:$0xff]
    %v400 = vld [vmem:[%s2 + $0x8d8] sm:$0xff]
    %v401 = vld [vmem:[%s2 + $0x8e0] sm:$0xff]
    %v402 = vld [vmem:[%s2 + $0x8e8] sm:$0xff]
    %v403 = vld [vmem:[%s2 + $0x8f0] sm:$0xff]
    %v404 = vld [vmem:[%s2 + $0x8f8] sm:$0xff]
    %v405 = vld [vmem:[%s2 + $0x900] sm:$0xff]
    %v406 = vld [vmem:[%s2 + $0x908] sm:$0xff]
    %v407 = vld [vmem:[%s2 + $0x910] sm:$0xff]
    %v408 = vld [vmem:[%s2 + $0x918] sm:$0xff]
    %v409 = vld [vmem:[%s2 + $0x920] sm:$0xff]
    %v410 = vld [vmem:[%s2 + $0x928] sm:$0xff]
    %v411 = vld [vmem:[%s2 + $0x930] sm:$0xff]
    %v412 = vld [vmem:[%s2 + $0x938] sm:$0xff]
    %v413 = vld [vmem:[%s2 + $0x940] sm:$0xff]
    %v414 = vld [vmem:[%s2 + $0x948] sm:$0xff]
    %v415 = vld [vmem:[%s2 + $0x950] sm:$0xff]
    %v416 = vld [vmem:[%s2 + $0x958] sm:$0xff]
    %v417 = vld [vmem:[%s2 + $0x960] sm:$0xff]
    %v418 = vld [vmem:[%s2 + $0x968] sm:$0xff]
    %v419 = vld [vmem:[%s2 + $0x970] sm:$0xff]
    %v420 = vld [vmem:[%s2 + $0x978] sm:$0xff]
    %421 = vmatprep.subr.mxu0 0.0
    %422 = vmatpush1.msra.mxu0 %v117
    %423 = vmatprep.subr.mxu0 0.0
    %424 = vmatpush1.msra.mxu0 %v118
    %425 = vmatprep.subr.mxu0 0.0
    %426 = vmatpush1.msra.mxu0 %v119
    %427 = vmatprep.subr.mxu0 0.0
    %428 = vmatpush1.msra.mxu0 %v120
    %429 = vmatprep.subr.mxu0 0.0
    %430 = vmatpush1.msra.mxu0 %v121
    %431 = vmatprep.subr.mxu0 0.0
    %432 = vmatpush1.msra.mxu0 %v122
    %433 = vmatprep.subr.mxu0 0.0
    %434 = vmatpush1.msra.mxu0 %v123
    %435 = vmatprep.subr.mxu0 0.0
    %436 = vmatpush1.msra.mxu0 %v124
    %437 = vmatprep.subr.mxu0 0.0
    %438 = vmatpush1.msra.mxu0 %v125
    %439 = vmatprep.subr.mxu0 0.0
    %440 = vmatpush1.msra.mxu0 %v126
    %441 = vmatprep.subr.mxu0 0.0
    %442 = vmatpush1.msra.mxu0 %v127
    %443 = vmatprep.subr.mxu0 0.0
    %444 = vmatpush1.msra.mxu0 %v128
    %445 = vmatprep.subr.mxu0 0.0
    %446 = vmatpush1.msra.mxu0 %v129
    %447 = vmatprep.subr.mxu0 0.0
    %448 = vmatpush1.msra.mxu0 %v130
    %449 = vmatprep.subr.mxu0 0.0
    %450 = vmatpush1.msra.mxu0 %v131
    %451 = vmatprep.subr.mxu0 0.0
    %452 = vmatpush1.msra.mxu0 %v132
    %453 = vmatprep.subr.mxu0 0.0
    %454 = vmatpush1.msra.mxu0 %v133
    %455 = vmatprep.subr.mxu0 0.0
    %456 = vmatpush1.msra.mxu0 %v134
    %457 = vmatprep.subr.mxu0 0.0
    %458 = vmatpush1.msra.mxu0 %v135
    %459 = vmatprep.subr.mxu0 0.0
    %460 = vmatpush1.msra.mxu0 %v136
    %461 = vmatprep.subr.mxu0 0.0
    %462 = vmatpush1.msra.mxu0 %v137
    %463 = vmatprep.subr.mxu0 0.0
    %464 = vmatpush1.msra.mxu0 %v138
    %465 = vmatprep.subr.mxu0 0.0
    %466 = vmatpush1.msra.mxu0 %v139
    %467 = vmatprep.subr.mxu0 0.0
    %468 = vmatpush1.msra.mxu0 %v140
    %469 = vmatprep.subr.mxu0 0.0
    %470 = vmatpush1.msra.mxu0 %v141
    %471 = vmatprep.subr.mxu0 0.0
    %472 = vmatpush1.msra.mxu0 %v142
    %473 = vmatprep.subr.mxu0 0.0
    %474 = vmatpush1.msra.mxu0 %v143
    %475 = vmatprep.subr.mxu0 0.0
    %476 = vmatpush1.msra.mxu0 %v144
    %477 = vmatprep.subr.mxu0 0.0
    %478 = vmatpush1.msra.mxu0 %v145
    %479 = vmatprep.subr.mxu0 0.0
    %480 = vmatpush1.msra.mxu0 %v146
    %481 = vmatprep.subr.mxu0 0.0
    %482 = vmatpush1.msra.mxu0 %v147
    %483 = vmatprep.subr.mxu0 0.0
    %484 = vmatpush1.msra.mxu0 %v148
    %485 = vmatprep.mubr.f32.mxu0 %v99
    %486 = vmatmul.mubr.f32.gmra.mrb[0].mxu0 %v98
    %v487 = vpop.f32.mrb[0].mxu0
    %v488 = vadd.f32 0.0, %v487
    %v489 = vpop.f32.mrb[0].mxu0
    %490 = vdwg.mxu0
    %491 = vmatprep.subr.mxu0 0.0
    %492 = vmatpush1.msra.mxu0 %v149
    %493 = vmatprep.subr.mxu0 0.0
    %494 = vmatpush1.msra.mxu0 %v150
    %495 = vmatprep.subr.mxu0 0.0
    %496 = vmatpush1.msra.mxu0 %v151
    %497 = vmatprep.subr.mxu0 0.0
    %498 = vmatpush1.msra.mxu0 %v152
    %499 = vmatprep.subr.mxu0 0.0
    %500 = vmatpush1.msra.mxu0 %v153
    %501 = vmatprep.subr.mxu0 0.0
    %502 = vmatpush1.msra.mxu0 %v154
    %503 = vmatprep.subr.mxu0 0.0
    %504 = vmatpush1.msra.mxu0 %v155
    %505 = vmatprep.subr.mxu0 0.0
    %506 = vmatpush1.msra.mxu0 %v156
    %507 = vmatprep.subr.mxu0 0.0
    %508 = vmatpush1.msra.mxu0 %v157
    %509 = vmatprep.subr.mxu0 0.0
    %510 = vmatpush1.msra.mxu0 %v158
    %511 = vmatprep.subr.mxu0 0.0
    %512 = vmatpush1.msra.mxu0 %v159
    %513 = vmatprep.subr.mxu0 0.0
    %514 = vmatpush1.msra.mxu0 %v160
    %515 = vmatprep.subr.mxu0 0.0
    %516 = vmatpush1.msra.mxu0 %v161
    %517 = vmatprep.subr.mxu0 0.0
    %518 = vmatpush1.msra.mxu0 %v162
    %519 = vmatprep.subr.mxu0 0.0
    %520 = vmatpush1.msra.mxu0 %v163
    %521 = vmatprep.subr.mxu0 0.0
    %522 = vmatpush1.msra.mxu0 %v164
    %523 = vmatprep.subr.mxu0 0.0
    %524 = vmatpush1.msra.mxu0 %v165
    %525 = vmatprep.subr.mxu0 0.0
    %526 = vmatpush1.msra.mxu0 %v166
    %527 = vmatprep.subr.mxu0 0.0
    %528 = vmatpush1.msra.mxu0 %v167
    %529 = vmatprep.subr.mxu0 0.0
    %530 = vmatpush1.msra.mxu0 %v168
    %531 = vmatprep.subr.mxu0 0.0
    %532 = vmatpush1.msra.mxu0 %v169
    %533 = vmatprep.subr.mxu0 0.0
    %534 = vmatpush1.msra.mxu0 %v170
    %535 = vmatprep.subr.mxu0 0.0
    %536 = vmatpush1.msra.mxu0 %v171
    %537 = vmatprep.subr.mxu0 0.0
    %538 = vmatpush1.msra.mxu0 %v172
    %539 = vmatprep.subr.mxu0 0.0
    %540 = vmatpush1.msra.mxu0 %v173
    %541 = vmatprep.subr.mxu0 0.0
    %542 = vmatpush1.msra.mxu0 %v174
    %543 = vmatprep.subr.mxu0 0.0
    %544 = vmatpush1.msra.mxu0 %v175
    %545 = vmatprep.subr.mxu0 0.0
    %546 = vmatpush1.msra.mxu0 %v176
    %547 = vmatprep.subr.mxu0 0.0
    %548 = vmatpush1.msra.mxu0 %v177
    %549 = vmatprep.subr.mxu0 0.0
    %550 = vmatpush1.msra.mxu0 %v178
    %551 = vmatprep.subr.mxu0 0.0
    %552 = vmatpush1.msra.mxu0 %v179
    %553 = vmatprep.subr.mxu0 0.0
    %554 = vmatpush1.msra.mxu0 %v180
    %555 = vmatprep.mubr.f32.mxu0 %v101
    %556 = vmatmul.mubr.f32.gmra.mrb[0].mxu0 %v100
    %v557 = vpop.f32.mrb[0].mxu0
    %v558 = vadd.f32 %v488, %v557
    %v559 = vpop.f32.mrb[0].mxu0
    %560 = vdwg.mxu0
    %561 = vmatprep.subr.mxu0 0.0
    %562 = vmatpush1.msra.mxu0 %v181
    %563 = vmatprep.subr.mxu0 0.0
    %564 = vmatpush1.msra.mxu0 %v182
    %565 = vmatprep.subr.mxu0 0.0
    %566 = vmatpush1.msra.mxu0 %v183
    %567 = vmatprep.subr.mxu0 0.0
    %568 = vmatpush1.msra.mxu0 %v184
    %569 = vmatprep.subr.mxu0 0.0
    %570 = vmatpush1.msra.mxu0 %v185
    %571 = vmatprep.subr.mxu0 0.0
    %572 = vmatpush1.msra.mxu0 %v186
    %573 = vmatprep.subr.mxu0 0.0
    %574 = vmatpush1.msra.mxu0 %v187
    %575 = vmatprep.subr.mxu0 0.0
    %576 = vmatpush1.msra.mxu0 %v188
    %577 = vmatprep.subr.mxu0 0.0
    %578 = vmatpush1.msra.mxu0 %v189
    %579 = vmatprep.subr.mxu0 0.0
    %580 = vmatpush1.msra.mxu0 %v190
    %581 = vmatprep.subr.mxu0 0.0
    %582 = vmatpush1.msra.mxu0 %v191
    %583 = vmatprep.subr.mxu0 0.0
    %584 = vmatpush1.msra.mxu0 %v192
    %585 = vmatprep.subr.mxu0 0.0
    %586 = vmatpush1.msra.mxu0 %v193
    %587 = vmatprep.subr.mxu0 0.0
    %588 = vmatpush1.msra.mxu0 %v194
    %589 = vmatprep.subr.mxu0 0.0
    %590 = vmatpush1.msra.mxu0 %v195
    %591 = vmatprep.subr.mxu0 0.0
    %592 = vmatpush1.msra.mxu0 %v196
    %593 = vmatprep.subr.mxu0 0.0
    %594 = vmatpush1.msra.mxu0 %v197
    %595 = vmatprep.subr.mxu0 0.0
    %596 = vmatpush1.msra.mxu0 %v198
    %597 = vmatprep.subr.mxu0 0.0
    %598 = vmatpush1.msra.mxu0 %v199
    %599 = vmatprep.subr.mxu0 0.0
    %600 = vmatpush1.msra.mxu0 %v200
    %601 = vmatprep.subr.mxu0 0.0
    %602 = vmatpush1.msra.mxu0 %v201
    %603 = vmatprep.subr.mxu0 0.0
    %604 = vmatpush1.msra.mxu0 %v202
    %605 = vmatprep.subr.mxu0 0.0
    %606 = vmatpush1.msra.mxu0 %v203
    %607 = vmatprep.subr.mxu0 0.0
    %608 = vmatpush1.msra.mxu0 %v204
    %609 = vmatprep.subr.mxu0 0.0
    %610 = vmatpush1.msra.mxu0 %v205
    %611 = vmatprep.subr.mxu0 0.0
    %612 = vmatpush1.msra.mxu0 %v206
    %613 = vmatprep.subr.mxu0 0.0
    %614 = vmatpush1.msra.mxu0 %v207
    %615 = vmatprep.subr.mxu0 0.0
    %616 = vmatpush1.msra.mxu0 %v208
    %617 = vmatprep.subr.mxu0 0.0
    %618 = vmatpush1.msra.mxu0 %v209
    %619 = vmatprep.subr.mxu0 0.0
    %620 = vmatpush1.msra.mxu0 %v210
    %621 = vmatprep.subr.mxu0 0.0
    %622 = vmatpush1.msra.mxu0 %v211
    %623 = vmatprep.subr.mxu0 0.0
    %624 = vmatpush1.msra.mxu0 %v212
    %625 = vmatprep.mubr.f32.mxu0 %v103
    %626 = vmatmul.mubr.f32.gmra.mrb[0].mxu0 %v102
    %v627 = vpop.f32.mrb[0].mxu0
    %v628 = vadd.f32 %v558, %v627
    %v629 = vpop.f32.mrb[0].mxu0
    %630 = vdwg.mxu0
    %631 = vmatprep.subr.mxu0 0.0
    %632 = vmatpush1.msra.mxu0 %v213
    %633 = vmatprep.subr.mxu0 0.0
    %634 = vmatpush1.msra.mxu0 %v214
    %635 = vmatprep.subr.mxu0 0.0
    %636 = vmatpush1.msra.mxu0 %v215
    %637 = vmatprep.subr.mxu0 0.0
    %638 = vmatpush1.msra.mxu0 %v216
    %639 = vmatprep.subr.mxu0 0.0
    %640 = vmatpush1.msra.mxu0 %v217
    %641 = vmatprep.subr.mxu0 0.0
    %642 = vmatpush1.msra.mxu0 %v218
    %643 = vmatprep.subr.mxu0 0.0
    %644 = vmatpush1.msra.mxu0 %v219
    %645 = vmatprep.subr.mxu0 0.0
    %646 = vmatpush1.msra.mxu0 %v220
    %647 = vmatprep.subr.mxu0 0.0
    %648 = vmatpush1.msra.mxu0 %v221
    %649 = vmatprep.subr.mxu0 0.0
    %650 = vmatpush1.msra.mxu0 %v222
    %651 = vmatprep.subr.mxu0 0.0
    %652 = vmatpush1.msra.mxu0 %v223
    %653 = vmatprep.subr.mxu0 0.0
    %654 = vmatpush1.msra.mxu0 %v224
    %655 = vmatprep.subr.mxu0 0.0
    %656 = vmatpush1.msra.mxu0 %v225
    %657 = vmatprep.subr.mxu0 0.0
    %658 = vmatpush1.msra.mxu0 %v226
    %659 = vmatprep.subr.mxu0 0.0
    %660 = vmatpush1.msra.mxu0 %v227
    %661 = vmatprep.subr.mxu0 0.0
    %662 = vmatpush1.msra.mxu0 %v228
    %663 = vmatprep.subr.mxu0 0.0
    %664 = vmatpush1.msra.mxu0 %v229
    %665 = vmatprep.subr.mxu0 0.0
    %666 = vmatpush1.msra.mxu0 %v230
    %667 = vmatprep.subr.mxu0 0.0
    %668 = vmatpush1.msra.mxu0 %v231
    %669 = vmatprep.subr.mxu0 0.0
    %670 = vmatpush1.msra.mxu0 %v232
    %671 = vmatprep.subr.mxu0 0.0
    %672 = vmatpush1.msra.mxu0 %v233
    %673 = vmatprep.subr.mxu0 0.0
    %674 = vmatpush1.msra.mxu0 %v234
    %675 = vmatprep.subr.mxu0 0.0
    %676 = vmatpush1.msra.mxu0 %v235
    %677 = vmatprep.subr.mxu0 0.0
    %678 = vmatpush1.msra.mxu0 %v236
    %679 = vmatprep.subr.mxu0 0.0
    %680 = vmatpush1.msra.mxu0 %v237
    %681 = vmatprep.subr.mxu0 0.0
    %682 = vmatpush1.msra.mxu0 %v238
    %683 = vmatprep.subr.mxu0 0.0
    %684 = vmatpush1.msra.mxu0 %v239
    %685 = vmatprep.subr.mxu0 0.0
    %686 = vmatpush1.msra.mxu0 %v240
    %687 = vmatprep.subr.mxu0 0.0
    %688 = vmatpush1.msra.mxu0 %v241
    %689 = vmatprep.subr.mxu0 0.0
    %690 = vmatpush1.msra.mxu0 %v242
    %691 = vmatprep.subr.mxu0 0.0
    %692 = vmatpush1.msra.mxu0 %v243
    %693 = vmatprep.subr.mxu0 0.0
    %694 = vmatpush1.msra.mxu0 %v244
    %695 = vmatprep.mubr.f32.mxu0 %v105
    %696 = vmatmul.mubr.f32.gmra.mrb[0].mxu0 %v104
    %v697 = vpop.f32.mrb[0].mxu0
    %v698 = vadd.f32 %v628, %v697
    %v699 = vpop.f32.mrb[0].mxu0
    %700 = vdwg.mxu0
    %701 = vmatprep.subr.mxu0 0.0
    %702 = vmatpush1.msra.mxu0 %v245
    %703 = vmatprep.subr.mxu0 0.0
    %704 = vmatpush1.msra.mxu0 %v246
    %705 = vmatprep.subr.mxu0 0.0
    %706 = vmatpush1.msra.mxu0 %v247
    %707 = vmatprep.subr.mxu0 0.0
    %708 = vmatpush1.msra.mxu0 %v248
    %709 = vmatprep.subr.mxu0 0.0
    %710 = vmatpush1.msra.mxu0 %v249
    %711 = vmatprep.subr.mxu0 0.0
    %712 = vmatpush1.msra.mxu0 %v250
    %713 = vmatprep.subr.mxu0 0.0
    %714 = vmatpush1.msra.mxu0 %v251
    %715 = vmatprep.subr.mxu0 0.0
    %716 = vmatpush1.msra.mxu0 %v252
    %717 = vmatprep.subr.mxu0 0.0
    %718 = vmatpush1.msra.mxu0 %v253
    %719 = vmatprep.subr.mxu0 0.0
    %720 = vmatpush1.msra.mxu0 %v254
    %721 = vmatprep.subr.mxu0 0.0
    %722 = vmatpush1.msra.mxu0 %v255
    %723 = vmatprep.subr.mxu0 0.0
    %724 = vmatpush1.msra.mxu0 %v256
    %725 = vmatprep.subr.mxu0 0.0
    %726 = vmatpush1.msra.mxu0 %v257
    %727 = vmatprep.subr.mxu0 0.0
    %728 = vmatpush1.msra.mxu0 %v258
    %729 = vmatprep.subr.mxu0 0.0
    %730 = vmatpush1.msra.mxu0 %v259
    %731 = vmatprep.subr.mxu0 0.0
    %732 = vmatpush1.msra.mxu0 %v260
    %733 = vmatprep.subr.mxu0 0.0
    %734 = vmatpush1.msra.mxu0 %v261
    %735 = vmatprep.subr.mxu0 0.0
    %736 = vmatpush1.msra.mxu0 %v262
    %737 = vmatprep.subr.mxu0 0.0
    %738 = vmatpush1.msra.mxu0 %v263
    %739 = vmatprep.subr.mxu0 0.0
    %740 = vmatpush1.msra.mxu0 %v264
    %741 = vmatprep.subr.mxu0 0.0
    %742 = vmatpush1.msra.mxu0 %v265
    %743 = vmatprep.subr.mxu0 0.0
    %744 = vmatpush1.msra.mxu0 %v266
    %745 = vmatprep.subr.mxu0 0.0
    %746 = vmatpush1.msra.mxu0 %v267
    %747 = vmatprep.subr.mxu0 0.0
    %748 = vmatpush1.msra.mxu0 %v268
    %749 = vmatprep.subr.mxu0 0.0
    %750 = vmatpush1.msra.mxu0 %v269
    %751 = vmatprep.subr.mxu0 0.0
    %752 = vmatpush1.msra.mxu0 %v270
    %753 = vmatprep.subr.mxu0 0.0
    %754 = vmatpush1.msra.mxu0 %v271
    %755 = vmatprep.subr.mxu0 0.0
    %756 = vmatpush1.msra.mxu0 %v272
    %757 = vmatprep.subr.mxu0 0.0
    %758 = vmatpush1.msra.mxu0 %v273
    %759 = vmatprep.subr.mxu0 0.0
    %760 = vmatpush1.msra.mxu0 %v274
    %761 = vmatprep.subr.mxu0 0.0
    %762 = vmatpush1.msra.mxu0 %v275
    %763 = vmatprep.subr.mxu0 0.0
    %764 = vmatpush1.msra.mxu0 %v276
    %765 = vmatprep.mubr.f32.mxu0 %v107
    %766 = vmatmul.mubr.f32.gmra.mrb[0].mxu0 %v106
    %v767 = vpop.f32.mrb[0].mxu0
    %v768 = vadd.f32 %v698, %v767
    %v769 = vpop.f32.mrb[0].mxu0
    %770 = vdwg.mxu0
    %771 = vmatprep.subr.mxu0 0.0
    %772 = vmatpush1.msra.mxu0 %v277
    %773 = vmatprep.subr.mxu0 0.0
    %774 = vmatpush1.msra.mxu0 %v278
    %775 = vmatprep.subr.mxu0 0.0
    %776 = vmatpush1.msra.mxu0 %v279
    %777 = vmatprep.subr.mxu0 0.0
    %778 = vmatpush1.msra.mxu0 %v280
    %779 = vmatprep.subr.mxu0 0.0
    %780 = vmatpush1.msra.mxu0 %v281
    %781 = vmatprep.subr.mxu0 0.0
    %782 = vmatpush1.msra.mxu0 %v282
    %783 = vmatprep.subr.mxu0 0.0
    %784 = vmatpush1.msra.mxu0 %v283
    %785 = vmatprep.subr.mxu0 0.0
    %786 = vmatpush1.msra.mxu0 %v284
    %787 = vmatprep.subr.mxu0 0.0
    %788 = vmatpush1.msra.mxu0 %v285
    %789 = vmatprep.subr.mxu0 0.0
    %790 = vmatpush1.msra.mxu0 %v286
    %791 = vmatprep.subr.mxu0 0.0
    %792 = vmatpush1.msra.mxu0 %v287
    %793 = vmatprep.subr.mxu0 0.0
    %794 = vmatpush1.msra.mxu0 %v288
    %795 = vmatprep.subr.mxu0 0.0
    %796 = vmatpush1.msra.mxu0 %v289
    %797 = vmatprep.subr.mxu0 0.0
    %798 = vmatpush1.msra.mxu0 %v290
    %799 = vmatprep.subr.mxu0 0.0
    %800 = vmatpush1.msra.mxu0 %v291
    %801 = vmatprep.subr.mxu0 0.0
    %802 = vmatpush1.msra.mxu0 %v292
    %803 = vmatprep.subr.mxu0 0.0
    %804 = vmatpush1.msra.mxu0 %v293
    %805 = vmatprep.subr.mxu0 0.0
    %806 = vmatpush1.msra.mxu0 %v294
    %807 = vmatprep.subr.mxu0 0.0
    %808 = vmatpush1.msra.mxu0 %v295
    %809 = vmatprep.subr.mxu0 0.0
    %810 = vmatpush1.msra.mxu0 %v296
    %811 = vmatprep.subr.mxu0 0.0
    %812 = vmatpush1.msra.mxu0 %v297
    %813 = vmatprep.subr.mxu0 0.0
    %814 = vmatpush1.msra.mxu0 %v298
    %815 = vmatprep.subr.mxu0 0.0
    %816 = vmatpush1.msra.mxu0 %v299
    %817 = vmatprep.subr.mxu0 0.0
    %818 = vmatpush1.msra.mxu0 %v300
    %819 = vmatprep.subr.mxu0 0.0
    %820 = vmatpush1.msra.mxu0 %v301
    %821 = vmatprep.subr.mxu0 0.0
    %822 = vmatpush1.msra.mxu0 %v302
    %823 = vmatprep.subr.mxu0 0.0
    %824 = vmatpush1.msra.mxu0 %v303
    %825 = vmatprep.subr.mxu0 0.0
    %826 = vmatpush1.msra.mxu0 %v304
    %827 = vmatprep.subr.mxu0 0.0
    %828 = vmatpush1.msra.mxu0 %v305
    %829 = vmatprep.subr.mxu0 0.0
    %830 = vmatpush1.msra.mxu0 %v306
    %831 = vmatprep.subr.mxu0 0.0
    %832 = vmatpush1.msra.mxu0 %v307
    %833 = vmatprep.subr.mxu0 0.0
    %834 = vmatpush1.msra.mxu0 %v308
    %835 = vmatprep.mubr.f32.mxu0 %v109
    %836 = vmatmul.mubr.f32.gmra.mrb[0].mxu0 %v108
    %v837 = vpop.f32.mrb[0].mxu0
    %v838 = vadd.f32 %v768, %v837
    %v839 = vpop.f32.mrb[0].mxu0
    %840 = vdwg.mxu0
    %841 = vmatprep.subr.mxu0 0.0
    %842 = vmatpush1.msra.mxu0 %v309
    %843 = vmatprep.subr.mxu0 0.0
    %844 = vmatpush1.msra.mxu0 %v310
    %845 = vmatprep.subr.mxu0 0.0
    %846 = vmatpush1.msra.mxu0 %v311
    %847 = vmatprep.subr.mxu0 0.0
    %848 = vmatpush1.msra.mxu0 %v312
    %849 = vmatprep.subr.mxu0 0.0
    %850 = vmatpush1.msra.mxu0 %v313
    %851 = vmatprep.subr.mxu0 0.0
    %852 = vmatpush1.msra.mxu0 %v314
    %853 = vmatprep.subr.mxu0 0.0
    %854 = vmatpush1.msra.mxu0 %v315
    %855 = vmatprep.subr.mxu0 0.0
    %856 = vmatpush1.msra.mxu0 %v316
    %857 = vmatprep.subr.mxu0 0.0
    %858 = vmatpush1.msra.mxu0 %v317
    %859 = vmatprep.subr.mxu0 0.0
    %860 = vmatpush1.msra.mxu0 %v318
    %861 = vmatprep.subr.mxu0 0.0
    %862 = vmatpush1.msra.mxu0 %v319
    %863 = vmatprep.subr.mxu0 0.0
    %864 = vmatpush1.msra.mxu0 %v320
    %865 = vmatprep.subr.mxu0 0.0
    %866 = vmatpush1.msra.mxu0 %v321
    %867 = vmatprep.subr.mxu0 0.0
    %868 = vmatpush1.msra.mxu0 %v322
    %869 = vmatprep.subr.mxu0 0.0
    %870 = vmatpush1.msra.mxu0 %v323
    %871 = vmatprep.subr.mxu0 0.0
    %872 = vmatpush1.msra.mxu0 %v324
    %873 = vmatprep.subr.mxu0 0.0
    %874 = vmatpush1.msra.mxu0 %v325
    %875 = vmatprep.subr.mxu0 0.0
    %876 = vmatpush1.msra.mxu0 %v326
    %877 = vmatprep.subr.mxu0 0.0
    %878 = vmatpush1.msra.mxu0 %v327
    %879 = vmatprep.subr.mxu0 0.0
    %880 = vmatpush1.msra.mxu0 %v328
    %881 = vmatprep.subr.mxu0 0.0
    %882 = vmatpush1.msra.mxu0 %v329
    %883 = vmatprep.subr.mxu0 0.0
    %884 = vmatpush1.msra.mxu0 %v330
    %885 = vmatprep.subr.mxu0 0.0
    %886 = vmatpush1.msra.mxu0 %v331
    %887 = vmatprep.subr.mxu0 0.0
    %888 = vmatpush1.msra.mxu0 %v332
    %889 = vmatprep.subr.mxu0 0.0
    %890 = vmatpush1.msra.mxu0 %v333
    %891 = vmatprep.subr.mxu0 0.0
    %892 = vmatpush1.msra.mxu0 %v334
    %893 = vmatprep.subr.mxu0 0.0
    %894 = vmatpush1.msra.mxu0 %v335
    %895 = vmatprep.subr.mxu0 0.0
    %896 = vmatpush1.msra.mxu0 %v336
    %897 = vmatprep.subr.mxu0 0.0
    %898 = vmatpush1.msra.mxu0 %v337
    %899 = vmatprep.subr.mxu0 0.0
    %900 = vmatpush1.msra.mxu0 %v338
    %901 = vmatprep.subr.mxu0 0.0
    %902 = vmatpush1.msra.mxu0 %v339
    %903 = vmatprep.subr.mxu0 0.0
    %904 = vmatpush1.msra.mxu0 %v340
    %905 = vmatprep.mubr.f32.mxu0 %v111
    %906 = vmatmul.mubr.f32.gmra.mrb[0].mxu0 %v110
    %v907 = vpop.f32.mrb[0].mxu0
    %v908 = vadd.f32 %v838, %v907
    %v909 = vpop.f32.mrb[0].mxu0
    %910 = vdwg.mxu0
    %911 = vmatprep.subr.mxu0 0.0
    %912 = vmatpush1.msra.mxu0 %v341
    %913 = vmatprep.subr.mxu0 0.0
    %914 = vmatpush1.msra.mxu0 %v342
    %915 = vmatprep.subr.mxu0 0.0
    %916 = vmatpush1.msra.mxu0 %v343
    %917 = vmatprep.subr.mxu0 0.0
    %918 = vmatpush1.msra.mxu0 %v344
    %919 = vmatprep.subr.mxu0 0.0
    %920 = vmatpush1.msra.mxu0 %v345
    %921 = vmatprep.subr.mxu0 0.0
    %922 = vmatpush1.msra.mxu0 %v346
    %923 = vmatprep.subr.mxu0 0.0
    %924 = vmatpush1.msra.mxu0 %v347
    %925 = vmatprep.subr.mxu0 0.0
    %926 = vmatpush1.msra.mxu0 %v348
    %927 = vmatprep.subr.mxu0 0.0
    %928 = vmatpush1.msra.mxu0 %v349
    %929 = vmatprep.subr.mxu0 0.0
    %930 = vmatpush1.msra.mxu0 %v350
    %931 = vmatprep.subr.mxu0 0.0
    %932 = vmatpush1.msra.mxu0 %v351
    %933 = vmatprep.subr.mxu0 0.0
    %934 = vmatpush1.msra.mxu0 %v352
    %935 = vmatprep.subr.mxu0 0.0
    %936 = vmatpush1.msra.mxu0 %v353
    %937 = vmatprep.subr.mxu0 0.0
    %938 = vmatpush1.msra.mxu0 %v354
    %939 = vmatprep.subr.mxu0 0.0
    %940 = vmatpush1.msra.mxu0 %v355
    %941 = vmatprep.subr.mxu0 0.0
    %942 = vmatpush1.msra.mxu0 %v356
    %943 = vmatprep.subr.mxu0 0.0
    %944 = vmatpush1.msra.mxu0 %v357
    %945 = vmatprep.subr.mxu0 0.0
    %946 = vmatpush1.msra.mxu0 %v358
    %947 = vmatprep.subr.mxu0 0.0
    %948 = vmatpush1.msra.mxu0 %v359
    %949 = vmatprep.subr.mxu0 0.0
    %950 = vmatpush1.msra.mxu0 %v360
    %951 = vmatprep.subr.mxu0 0.0
    %952 = vmatpush1.msra.mxu0 %v361
    %953 = vmatprep.subr.mxu0 0.0
    %954 = vmatpush1.msra.mxu0 %v362
    %955 = vmatprep.subr.mxu0 0.0
    %956 = vmatpush1.msra.mxu0 %v363
    %957 = vmatprep.subr.mxu0 0.0
    %958 = vmatpush1.msra.mxu0 %v364
    %959 = vmatprep.subr.mxu0 0.0
    %960 = vmatpush1.msra.mxu0 %v365
    %961 = vmatprep.subr.mxu0 0.0
    %962 = vmatpush1.msra.mxu0 %v366
    %963 = vmatprep.subr.mxu0 0.0
    %964 = vmatpush1.msra.mxu0 %v367
    %965 = vmatprep.subr.mxu0 0.0
    %966 = vmatpush1.msra.mxu0 %v368
    %967 = vmatprep.subr.mxu0 0.0
    %968 = vmatpush1.msra.mxu0 %v369
    %969 = vmatprep.subr.mxu0 0.0
    %970 = vmatpush1.msra.mxu0 %v370
    %971 = vmatprep.subr.mxu0 0.0
    %972 = vmatpush1.msra.mxu0 %v371
    %973 = vmatprep.subr.mxu0 0.0
    %974 = vmatpush1.msra.mxu0 %v372
    %975 = vmatprep.mubr.f32.mxu0 %v113
    %976 = vmatmul.mubr.f32.gmra.mrb[0].mxu0 %v112
    %v977 = vpop.f32.mrb[0].mxu0
    %v978 = vadd.f32 %v908, %v977
    %v979 = vpop.f32.mrb[0].mxu0
    %980 = vdwg.mxu0
    %981 = vmatprep.subr.mxu0 0.0
    %982 = vmatpush1.msra.mxu0 %v373
    %983 = vmatprep.subr.mxu0 0.0
    %984 = vmatpush1.msra.mxu0 %v374
    %985 = vmatprep.subr.mxu0 0.0
    %986 = vmatpush1.msra.mxu0 %v375
    %987 = vmatprep.subr.mxu0 0.0
    %988 = vmatpush1.msra.mxu0 %v376
    %989 = vmatprep.subr.mxu0 0.0
    %990 = vmatpush1.msra.mxu0 %v377
    %991 = vmatprep.subr.mxu0 0.0
    %992 = vmatpush1.msra.mxu0 %v378
    %993 = vmatprep.subr.mxu0 0.0
    %994 = vmatpush1.msra.mxu0 %v379
    %995 = vmatprep.subr.mxu0 0.0
    %996 = vmatpush1.msra.mxu0 %v380
    %997 = vmatprep.subr.mxu0 0.0
    %998 = vmatpush1.msra.mxu0 %v381
    %999 = vmatprep.subr.mxu0 0.0
    %1000 = vmatpush1.msra.mxu0 %v382
    %1001 = vmatprep.subr.mxu0 0.0
    %1002 = vmatpush1.msra.mxu0 %v383
    %1003 = vmatprep.subr.mxu0 0.0
    %1004 = vmatpush1.msra.mxu0 %v384
    %1005 = vmatprep.subr.mxu0 0.0
    %1006 = vmatpush1.msra.mxu0 %v385
    %1007 = vmatprep.subr.mxu0 0.0
    %1008 = vmatpush1.msra.mxu0 %v386
    %1009 = vmatprep.subr.mxu0 0.0
    %1010 = vmatpush1.msra.mxu0 %v387
    %1011 = vmatprep.subr.mxu0 0.0
    %1012 = vmatpush1.msra.mxu0 %v388
    %1013 = vmatprep.subr.mxu0 0.0
    %1014 = vmatpush1.msra.mxu0 %v389
    %1015 = vmatprep.subr.mxu0 0.0
    %1016 = vmatpush1.msra.mxu0 %v390
    %1017 = vmatprep.subr.mxu0 0.0
    %1018 = vmatpush1.msra.mxu0 %v391
    %1019 = vmatprep.subr.mxu0 0.0
    %1020 = vmatpush1.msra.mxu0 %v392
    %1021 = vmatprep.subr.mxu0 0.0
    %1022 = vmatpush1.msra.mxu0 %v393
    %1023 = vmatprep.subr.mxu0 0.0
    %1024 = vmatpush1.msra.mxu0 %v394
    %1025 = vmatprep.subr.mxu0 0.0
    %1026 = vmatpush1.msra.mxu0 %v395
    %1027 = vmatprep.subr.mxu0 0.0
    %1028 = vmatpush1.msra.mxu0 %v396
    %1029 = vmatprep.subr.mxu0 0.0
    %1030 = vmatpush1.msra.mxu0 %v397
    %1031 = vmatprep.subr.mxu0 0.0
    %1032 = vmatpush1.msra.mxu0 %v398
    %1033 = vmatprep.subr.mxu0 0.0
    %1034 = vmatpush1.msra.mxu0 %v399
    %1035 = vmatprep.subr.mxu0 0.0
    %1036 = vmatpush1.msra.mxu0 %v400
    %1037 = vmatprep.subr.mxu0 0.0
    %1038 = vmatpush1.msra.mxu0 %v401
    %1039 = vmatprep.subr.mxu0 0.0
    %1040 = vmatpush1.msra.mxu0 %v402
    %1041 = vmatprep.subr.mxu0 0.0
    %1042 = vmatpush1.msra.mxu0 %v403
    %1043 = vmatprep.subr.mxu0 0.0
    %1044 = vmatpush1.msra.mxu0 %v404
    %1045 = vmatprep.mubr.f32.mxu0 %v115
    %1046 = vmatmul.mubr.f32.gmra.mrb[0].mxu0 %v114
    %v1047 = vpop.f32.mrb[0].mxu0
    %v1048 = vadd.f32 %v978, %v1047
    %v1049 = vpop.f32.mrb[0].mxu0
    %1050 = vdwg.mxu0
    %1051 = vmatprep.subr.mxu0 0.0
    %1052 = vmatpush1.msra.mxu0 %v405
    %1053 = vmatprep.subr.mxu0 0.0
    %1054 = vmatpush1.msra.mxu0 %v406
    %1055 = vmatprep.subr.mxu0 0.0
    %1056 = vmatpush1.msra.mxu0 %v407
    %1057 = vmatprep.subr.mxu0 0.0
    %1058 = vmatpush1.msra.mxu0 %v408
    %1059 = vmatprep.subr.mxu0 0.0
    %1060 = vmatpush1.msra.mxu0 %v409
    %1061 = vmatprep.subr.mxu0 0.0
    %1062 = vmatpush1.msra.mxu0 %v410
    %1063 = vmatprep.subr.mxu0 0.0
    %1064 = vmatpush1.msra.mxu0 %v411
    %1065 = vmatprep.subr.mxu0 0.0
    %1066 = vmatpush1.msra.mxu0 %v412
    %1067 = vmatprep.subr.mxu0 0.0
    %1068 = vmatpush1.msra.mxu0 %v413
    %1069 = vmatprep.subr.mxu0 0.0
    %1070 = vmatpush1.msra.mxu0 %v414
    %1071 = vmatprep.subr.mxu0 0.0
    %1072 = vmatpush1.msra.mxu0 %v415
    %1073 = vmatprep.subr.mxu0 0.0
    %1074 = vmatpush1.msra.mxu0 %v416
    %1075 = vmatprep.subr.mxu0 0.0
    %1076 = vmatpush1.msra.mxu0 %v417
    %1077 = vmatprep.subr.mxu0 0.0
    %1078 = vmatpush1.msra.mxu0 %v418
    %1079 = vmatprep.subr.mxu0 0.0
    %1080 = vmatpush1.msra.mxu0 %v419
    %1081 = vmatprep.subr.mxu0 0.0
    %1082 = vmatpush1.msra.mxu0 %v420
    %1083 = vmatprep.subr.mxu0 0.0
    %1084 = vmatpush1.msra.mxu0 0.0
    %1085 = vmatprep.subr.mxu0 0.0
    %1086 = vmatpush1.msra.mxu0 0.0
    %1087 = vmatprep.subr.mxu0 0.0
    %1088 = vmatpush1.msra.mxu0 0.0
    %1089 = vmatprep.subr.mxu0 0.0
    %1090 = vmatpush1.msra.mxu0 0.0
    %1091 = vmatprep.subr.mxu0 0.0
    %1092 = vmatpush1.msra.mxu0 0.0
    %1093 = vmatprep.subr.mxu0 0.0
    %1094 = vmatpush1.msra.mxu0 0.0
    %1095 = vmatprep.subr.mxu0 0.0
    %1096 = vmatpush1.msra.mxu0 0.0
    %1097 = vmatprep.subr.mxu0 0.0
    %1098 = vmatpush1.msra.mxu0 0.0
    %1099 = vmatprep.subr.mxu0 0.0
    %1100 = vmatpush1.msra.mxu0 0.0
    %1101 = vmatprep.subr.mxu0 0.0
    %1102 = vmatpush1.msra.mxu0 0.0
    %1103 = vmatprep.subr.mxu0 0.0
    %1104 = vmatpush1.msra.mxu0 0.0
    %1105 = vmatprep.subr.mxu0 0.0
    %1106 = vmatpush1.msra.mxu0 0.0
    %1107 = vmatprep.subr.mxu0 0.0
    %1108 = vmatpush1.msra.mxu0 0.0
    %1109 = vmatprep.subr.mxu0 0.0
    %1110 = vmatpush1.msra.mxu0 0.0
    %1111 = vmatprep.subr.mxu0 0.0
    %1112 = vmatpush1.msra.mxu0 0.0
    %1113 = vmatprep.subr.mxu0 0.0
    %1114 = vmatpush1.msra.mxu0 0.0
    %1115 = vmatprep.mubr.f32.mxu0 0.0
    %1116 = vmatmul.mubr.f32.gmra.mrb[0].mxu0 %v116
    %v1117 = vpop.f32.mrb[0].mxu0
    %v1118 = vadd.f32 %v1048, %v1117
    %v1119 = vpop.f32.mrb[0].mxu0
    %1120 = vdwg.mxu0
    %v1121 = vld [vmem:[%s3] sm:$0xff]
    %v1122 = vld [vmem:[%s3 + $0x8] sm:$0xff]
    %v1123 = vld [vmem:[%s3 + $0x10] sm:$0xff]
    %v1124 = vld [vmem:[%s3 + $0x18] sm:$0xff]
    %v1125 = vld [vmem:[%s3 + $0x20] sm:$0xff]
    %v1126 = vld [vmem:[%s3 + $0x28] sm:$0xff]
    %v1127 = vld [vmem:[%s3 + $0x30] sm:$0xff]
    %v1128 = vld [vmem:[%s3 + $0x38] sm:$0xff]
    %v1129 = vld [vmem:[%s4] sm:$0x1]
    %v1131 = vlaneseq
    %v1132 = vshrl.u32 %v1131, 7
    %v1133 = vsub.s32 0, %v1132
    %v1134 = vrot.slane %v1129, %v1133
    %vm1136 = vcmask 523264
    %v1138 = vsel %vm1136, %v1118, 0
    %1140 = vmatprep.subr.mxu0 0.0
    %1141 = vmatpush1.msra.mxu0 %v1121
    %1142 = vmatprep.subr.mxu0 0.0
    %1143 = vmatpush1.msra.mxu0 %v1122
    %1144 = vmatprep.subr.mxu0 0.0
    %1145 = vmatpush1.msra.mxu0 %v1123
    %1146 = vmatprep.subr.mxu0 0.0
    %1147 = vmatpush1.msra.mxu0 %v1124
    %1148 = vmatprep.subr.mxu0 0.0
    %1149 = vmatpush1.msra.mxu0 %v1125
    %1150 = vmatprep.subr.mxu0 0.0
    %1151 = vmatpush1.msra.mxu0 %v1126
    %1152 = vmatprep.subr.mxu0 0.0
    %1153 = vmatpush1.msra.mxu0 %v1127
    %1154 = vmatprep.subr.mxu0 0.0
    %1155 = vmatpush1.msra.mxu0 %v1128
    %1156 = vmatprep.subr.mxu0 0.0
    %1157 = vmatpush1.msra.mxu0 0.0
    %1158 = vmatprep.subr.mxu0 0.0
    %1159 = vmatpush1.msra.mxu0 0.0
    %1160 = vmatprep.subr.mxu0 0.0
    %1161 = vmatpush1.msra.mxu0 0.0
    %1162 = vmatprep.subr.mxu0 0.0
    %1163 = vmatpush1.msra.mxu0 0.0
    %1164 = vmatprep.subr.mxu0 0.0
    %1165 = vmatpush1.msra.mxu0 0.0
    %1166 = vmatprep.subr.mxu0 0.0
    %1167 = vmatpush1.msra.mxu0 0.0
    %1168 = vmatprep.subr.mxu0 0.0
    %1169 = vmatpush1.msra.mxu0 0.0
    %1170 = vmatprep.subr.mxu0 0.0
    %1171 = vmatpush1.msra.mxu0 0.0
    %1172 = vmatprep.subr.mxu0 0.0
    %1173 = vmatpush1.msra.mxu0 0.0
    %1174 = vmatprep.subr.mxu0 0.0
    %1175 = vmatpush1.msra.mxu0 0.0
    %1176 = vmatprep.subr.mxu0 0.0
    %1177 = vmatpush1.msra.mxu0 0.0
    %1178 = vmatprep.subr.mxu0 0.0
    %1179 = vmatpush1.msra.mxu0 0.0
    %1180 = vmatprep.subr.mxu0 0.0
    %1181 = vmatpush1.msra.mxu0 0.0
    %1182 = vmatprep.subr.mxu0 0.0
    %1183 = vmatpush1.msra.mxu0 0.0
    %1184 = vmatprep.subr.mxu0 0.0
    %1185 = vmatpush1.msra.mxu0 0.0
    %1186 = vmatprep.subr.mxu0 0.0
    %1187 = vmatpush1.msra.mxu0 0.0
    %1188 = vmatprep.subr.mxu0 0.0
    %1189 = vmatpush1.msra.mxu0 0.0
    %1190 = vmatprep.subr.mxu0 0.0
    %1191 = vmatpush1.msra.mxu0 0.0
    %1192 = vmatprep.subr.mxu0 0.0
    %1193 = vmatpush1.msra.mxu0 0.0
    %1194 = vmatprep.subr.mxu0 0.0
    %1195 = vmatpush1.msra.mxu0 0.0
    %1196 = vmatprep.subr.mxu0 0.0
    %1197 = vmatpush1.msra.mxu0 0.0
    %1198 = vmatprep.subr.mxu0 0.0
    %1199 = vmatpush1.msra.mxu0 0.0
    %1200 = vmatprep.subr.mxu0 0.0
    %1201 = vmatpush1.msra.mxu0 0.0
    %1202 = vmatprep.subr.mxu0 0.0
    %1203 = vmatpush1.msra.mxu0 0.0
    %1204 = vmatprep.mubr.f32.mxu0 0.0
    %1205 = vmatmul.mubr.f32.gmra.mrb[0].mxu0 %v1138
    %v1206 = vpop.f32.mrb[0].mxu0
    %v1207 = vadd.f32 %v1134, %v1206
    %v1208 = vpop.f32.mrb[0].mxu0
    %1209 = vdwg.mxu0
    %vm1210 = vcmp.gt.f32.partialorder %v1207, 0.0
    %v1211 = vmul.f32 %v1207, 0.01
    %v1212 = vsel %vm1210, %v1207, %v1211
    %v1213 = vld [vmem:[%s0] sm:$0xff]
    %v1214 = vld [vmem:[%s5] sm:$0xff]
    %v1215 = vld [vmem:[%s5 + $0x8] sm:$0xff]
    %v1216 = vld [vmem:[%s5 + $0x10] sm:$0xff]
    %v1217 = vld [vmem:[%s5 + $0x18] sm:$0xff]
    %v1218 = vld [vmem:[%s5 + $0x20] sm:$0xff]
    %v1219 = vld [vmem:[%s5 + $0x28] sm:$0xff]
    %v1220 = vld [vmem:[%s5 + $0x30] sm:$0xff]
    %v1221 = vld [vmem:[%s5 + $0x38] sm:$0xff]
    %v1222 = vld [vmem:[%s5 + $0x40] sm:$0xff]
    %v1223 = vld [vmem:[%s5 + $0x48] sm:$0xff]
    %v1224 = vld [vmem:[%s5 + $0x50] sm:$0xff]
    %v1225 = vld [vmem:[%s5 + $0x58] sm:$0xff]
    %v1226 = vld [vmem:[%s5 + $0x60] sm:$0xff]
    %v1227 = vld [vmem:[%s5 + $0x68] sm:$0xff]
    %v1228 = vld [vmem:[%s5 + $0x70] sm:$0xff]
    %v1229 = vld [vmem:[%s5 + $0x78] sm:$0xff]
    %v1230 = vld [vmem:[%s6] sm:$0xff]
    %v1231 = vld [vmem:[%s6 + $0x8] sm:$0xff]
    %v1232 = vld [vmem:[%s6 + $0x10] sm:$0xff]
    %v1233 = vld [vmem:[%s6 + $0x18] sm:$0xff]
    %v1234 = vld [vmem:[%s6 + $0x20] sm:$0xff]
    %v1235 = vld [vmem:[%s6 + $0x28] sm:$0xff]
    %v1236 = vld [vmem:[%s6 + $0x30] sm:$0xff]
    %v1237 = vld [vmem:[%s6 + $0x38] sm:$0xff]
    %v1239 = vsel %vm1136, %v1212, 0
    %1241 = vmatprep.subr.mxu0 0.0
    %1242 = vmatpush1.msra.mxu0 %v1230
    %1243 = vmatprep.subr.mxu0 0.0
    %1244 = vmatpush1.msra.mxu0 %v1231
    %1245 = vmatprep.subr.mxu0 0.0
    %1246 = vmatpush1.msra.mxu0 %v1232
    %1247 = vmatprep.subr.mxu0 0.0
    %1248 = vmatpush1.msra.mxu0 %v1233
    %1249 = vmatprep.subr.mxu0 0.0
    %1250 = vmatpush1.msra.mxu0 %v1234
    %1251 = vmatprep.subr.mxu0 0.0
    %1252 = vmatpush1.msra.mxu0 %v1235
    %1253 = vmatprep.subr.mxu0 0.0
    %1254 = vmatpush1.msra.mxu0 %v1236
    %1255 = vmatprep.subr.mxu0 0.0
    %1256 = vmatpush1.msra.mxu0 %v1237
    %1257 = vmatprep.subr.mxu0 0.0
    %1258 = vmatpush1.msra.mxu0 0.0
    %1259 = vmatprep.subr.mxu0 0.0
    %1260 = vmatpush1.msra.mxu0 0.0
    %1261 = vmatprep.subr.mxu0 0.0
    %1262 = vmatpush1.msra.mxu0 0.0
    %1263 = vmatprep.subr.mxu0 0.0
    %1264 = vmatpush1.msra.mxu0 0.0
    %1265 = vmatprep.subr.mxu0 0.0
    %1266 = vmatpush1.msra.mxu0 0.0
    %1267 = vmatprep.subr.mxu0 0.0
    %1268 = vmatpush1.msra.mxu0 0.0
    %1269 = vmatprep.subr.mxu0 0.0
    %1270 = vmatpush1.msra.mxu0 0.0
    %1271 = vmatprep.subr.mxu0 0.0
    %1272 = vmatpush1.msra.mxu0 0.0
    %1273 = vmatprep.subr.mxu0 0.0
    %1274 = vmatpush1.msra.mxu0 0.0
    %1275 = vmatprep.subr.mxu0 0.0
    %1276 = vmatpush1.msra.mxu0 0.0
    %1277 = vmatprep.subr.mxu0 0.0
    %1278 = vmatpush1.msra.mxu0 0.0
    %1279 = vmatprep.subr.mxu0 0.0
    %1280 = vmatpush1.msra.mxu0 0.0
    %1281 = vmatprep.subr.mxu0 0.0
    %1282 = vmatpush1.msra.mxu0 0.0
    %1283 = vmatprep.subr.mxu0 0.0
    %1284 = vmatpush1.msra.mxu0 0.0
    %1285 = vmatprep.subr.mxu0 0.0
    %1286 = vmatpush1.msra.mxu0 0.0
    %1287 = vmatprep.subr.mxu0 0.0
    %1288 = vmatpush1.msra.mxu0 0.0
    %1289 = vmatprep.subr.mxu0 0.0
    %1290 = vmatpush1.msra.mxu0 0.0
    %1291 = vmatprep.subr.mxu0 0.0
    %1292 = vmatpush1.msra.mxu0 0.0
    %1293 = vmatprep.subr.mxu0 0.0
    %1294 = vmatpush1.msra.mxu0 0.0
    %1295 = vmatprep.subr.mxu0 0.0
    %1296 = vmatpush1.msra.mxu0 0.0
    %1297 = vmatprep.subr.mxu0 0.0
    %1298 = vmatpush1.msra.mxu0 0.0
    %1299 = vmatprep.subr.mxu0 0.0
    %1300 = vmatpush1.msra.mxu0 0.0
    %1301 = vmatprep.subr.mxu0 0.0
    %1302 = vmatpush1.msra.mxu0 0.0
    %1303 = vmatprep.subr.mxu0 0.0
    %1304 = vmatpush1.msra.mxu0 0.0
    %1305 = vmatprep.mubr.f32.mxu0 0.0
    %1306 = vmatmul.mubr.f32.gmra.mrb[0].mxu0 %v1239
    %v1307 = vpop.f32.mrb[0].mxu0
    %v1308 = vadd.f32 0.0, %v1307
    %v1309 = vpop.f32.mrb[0].mxu0
    %1310 = vdwg.mxu0
    %1311 = vmatprep.subr.mxu0 0.0
    %1312 = vmatpush1.msra.mxu0 %v1214
    %1313 = vmatprep.subr.mxu0 0.0
    %1314 = vmatpush1.msra.mxu0 %v1215
    %1315 = vmatprep.subr.mxu0 0.0
    %1316 = vmatpush1.msra.mxu0 %v1216
    %1317 = vmatprep.subr.mxu0 0.0
    %1318 = vmatpush1.msra.mxu0 %v1217
    %1319 = vmatprep.subr.mxu0 0.0
    %1320 = vmatpush1.msra.mxu0 %v1218
    %1321 = vmatprep.subr.mxu0 0.0
    %1322 = vmatpush1.msra.mxu0 %v1219
    %1323 = vmatprep.subr.mxu0 0.0
    %1324 = vmatpush1.msra.mxu0 %v1220
    %1325 = vmatprep.subr.mxu0 0.0
    %1326 = vmatpush1.msra.mxu0 %v1221
    %1327 = vmatprep.subr.mxu0 0.0
    %1328 = vmatpush1.msra.mxu0 %v1222
    %1329 = vmatprep.subr.mxu0 0.0
    %1330 = vmatpush1.msra.mxu0 %v1223
    %1331 = vmatprep.subr.mxu0 0.0
    %1332 = vmatpush1.msra.mxu0 %v1224
    %1333 = vmatprep.subr.mxu0 0.0
    %1334 = vmatpush1.msra.mxu0 %v1225
    %1335 = vmatprep.subr.mxu0 0.0
    %1336 = vmatpush1.msra.mxu0 %v1226
    %1337 = vmatprep.subr.mxu0 0.0
    %1338 = vmatpush1.msra.mxu0 %v1227
    %1339 = vmatprep.subr.mxu0 0.0
    %1340 = vmatpush1.msra.mxu0 %v1228
    %1341 = vmatprep.subr.mxu0 0.0
    %1342 = vmatpush1.msra.mxu0 %v1229
    %1343 = vmatprep.subr.mxu0 0.0
    %1344 = vmatpush1.msra.mxu0 0.0
    %1345 = vmatprep.subr.mxu0 0.0
    %1346 = vmatpush1.msra.mxu0 0.0
    %1347 = vmatprep.subr.mxu0 0.0
    %1348 = vmatpush1.msra.mxu0 0.0
    %1349 = vmatprep.subr.mxu0 0.0
    %1350 = vmatpush1.msra.mxu0 0.0
    %1351 = vmatprep.subr.mxu0 0.0
    %1352 = vmatpush1.msra.mxu0 0.0
    %1353 = vmatprep.subr.mxu0 0.0
    %1354 = vmatpush1.msra.mxu0 0.0
    %1355 = vmatprep.subr.mxu0 0.0
    %1356 = vmatpush1.msra.mxu0 0.0
    %1357 = vmatprep.subr.mxu0 0.0
    %1358 = vmatpush1.msra.mxu0 0.0
    %1359 = vmatprep.subr.mxu0 0.0
    %1360 = vmatpush1.msra.mxu0 0.0
    %1361 = vmatprep.subr.mxu0 0.0
    %1362 = vmatpush1.msra.mxu0 0.0
    %1363 = vmatprep.subr.mxu0 0.0
    %1364 = vmatpush1.msra.mxu0 0.0
    %1365 = vmatprep.subr.mxu0 0.0
    %1366 = vmatpush1.msra.mxu0 0.0
    %1367 = vmatprep.subr.mxu0 0.0
    %1368 = vmatpush1.msra.mxu0 0.0
    %1369 = vmatprep.subr.mxu0 0.0
    %1370 = vmatpush1.msra.mxu0 0.0
    %1371 = vmatprep.subr.mxu0 0.0
    %1372 = vmatpush1.msra.mxu0 0.0
    %1373 = vmatprep.subr.mxu0 0.0
    %1374 = vmatpush1.msra.mxu0 0.0
    %1375 = vmatprep.mubr.f32.mxu0 0.0
    %1376 = vmatmul.mubr.f32.gmra.mrb[0].mxu0 %v1213
    %v1377 = vpop.f32.mrb[0].mxu0
    %v1378 = vadd.f32 %v1308, %v1377
    %v1379 = vpop.f32.mrb[0].mxu0
    %1380 = vdwg.mxu0
    %v1381 = vld [vmem:[%s7] sm:$0x1]
    %v1383 = vlaneseq
    %v1384 = vshrl.u32 %v1383, 7
    %v1385 = vsub.s32 0, %v1384
    %v1386 = vrot.slane %v1381, %v1385
    %v1388 = vadd.f32 %v1378, %v1386
    %vm1389 = vcmp.gt.f32.partialorder %v1388, 0.0
    %v1390 = vmul.f32 %v1388, 0.01
    %v1391 = vsel %vm1389, %v1388, %v1390
    %v1392 = vld [vmem:[%s8] sm:$0xff]
    %v1393 = vld [vmem:[%s8 + $0x8] sm:$0xff]
    %v1394 = vld [vmem:[%s8 + $0x10] sm:$0xff]
    %v1395 = vld [vmem:[%s8 + $0x18] sm:$0xff]
    %v1396 = vld [vmem:[%s8 + $0x20] sm:$0xff]
    %v1397 = vld [vmem:[%s8 + $0x28] sm:$0xff]
    %v1398 = vld [vmem:[%s8 + $0x30] sm:$0xff]
    %v1399 = vld [vmem:[%s8 + $0x38] sm:$0xff]
    %v1400 = vld [vmem:[%s9] sm:$0x1]
    %v1402 = vlaneseq
    %v1403 = vshrl.u32 %v1402, 7
    %v1404 = vsub.s32 0, %v1403
    %v1405 = vrot.slane %v1400, %v1404
    %v1408 = vsel %vm1136, %v1391, 0
    %1410 = vmatprep.subr.mxu0 0.0
    %1411 = vmatpush1.msra.mxu0 %v1392
    %1412 = vmatprep.subr.mxu0 0.0
    %1413 = vmatpush1.msra.mxu0 %v1393
    %1414 = vmatprep.subr.mxu0 0.0
    %1415 = vmatpush1.msra.mxu0 %v1394
    %1416 = vmatprep.subr.mxu0 0.0
    %1417 = vmatpush1.msra.mxu0 %v1395
    %1418 = vmatprep.subr.mxu0 0.0
    %1419 = vmatpush1.msra.mxu0 %v1396
    %1420 = vmatprep.subr.mxu0 0.0
    %1421 = vmatpush1.msra.mxu0 %v1397
    %1422 = vmatprep.subr.mxu0 0.0
    %1423 = vmatpush1.msra.mxu0 %v1398
    %1424 = vmatprep.subr.mxu0 0.0
    %1425 = vmatpush1.msra.mxu0 %v1399
    %1426 = vmatprep.subr.mxu0 0.0
    %1427 = vmatpush1.msra.mxu0 0.0
    %1428 = vmatprep.subr.mxu0 0.0
    %1429 = vmatpush1.msra.mxu0 0.0
    %1430 = vmatprep.subr.mxu0 0.0
    %1431 = vmatpush1.msra.mxu0 0.0
    %1432 = vmatprep.subr.mxu0 0.0
    %1433 = vmatpush1.msra.mxu0 0.0
    %1434 = vmatprep.subr.mxu0 0.0
    %1435 = vmatpush1.msra.mxu0 0.0
    %1436 = vmatprep.subr.mxu0 0.0
    %1437 = vmatpush1.msra.mxu0 0.0
    %1438 = vmatprep.subr.mxu0 0.0
    %1439 = vmatpush1.msra.mxu0 0.0
    %1440 = vmatprep.subr.mxu0 0.0
    %1441 = vmatpush1.msra.mxu0 0.0
    %1442 = vmatprep.subr.mxu0 0.0
    %1443 = vmatpush1.msra.mxu0 0.0
    %1444 = vmatprep.subr.mxu0 0.0
    %1445 = vmatpush1.msra.mxu0 0.0
    %1446 = vmatprep.subr.mxu0 0.0
    %1447 = vmatpush1.msra.mxu0 0.0
    %1448 = vmatprep.subr.mxu0 0.0
    %1449 = vmatpush1.msra.mxu0 0.0
    %1450 = vmatprep.subr.mxu0 0.0
    %1451 = vmatpush1.msra.mxu0 0.0
    %1452 = vmatprep.subr.mxu0 0.0
    %1453 = vmatpush1.msra.mxu0 0.0
    %1454 = vmatprep.subr.mxu0 0.0
    %1455 = vmatpush1.msra.mxu0 0.0
    %1456 = vmatprep.subr.mxu0 0.0
    %1457 = vmatpush1.msra.mxu0 0.0
    %1458 = vmatprep.subr.mxu0 0.0
    %1459 = vmatpush1.msra.mxu0 0.0
    %1460 = vmatprep.subr.mxu0 0.0
    %1461 = vmatpush1.msra.mxu0 0.0
    %1462 = vmatprep.subr.mxu0 0.0
    %1463 = vmatpush1.msra.mxu0 0.0
    %1464 = vmatprep.subr.mxu0 0.0
    %1465 = vmatpush1.msra.mxu0 0.0
    %1466 = vmatprep.subr.mxu0 0.0
    %1467 = vmatpush1.msra.mxu0 0.0
    %1468 = vmatprep.subr.mxu0 0.0
    %1469 = vmatpush1.msra.mxu0 0.0
    %1470 = vmatprep.subr.mxu0 0.0
    %1471 = vmatpush1.msra.mxu0 0.0
    %1472 = vmatprep.subr.mxu0 0.0
    %1473 = vmatpush1.msra.mxu0 0.0
    %1474 = vmatprep.mubr.f32.mxu0 0.0
    %1475 = vmatmul.mubr.f32.gmra.mrb[0].mxu0 %v1408
    %v1476 = vpop.f32.mrb[0].mxu0
    %v1477 = vadd.f32 %v1405, %v1476
    %v1478 = vpop.f32.mrb[0].mxu0
    %1479 = vdwg.mxu0
    %1481 = vrot.lane.b32.xlu0 %v1477, 64
    %v1482 = vpop.permute.xlu0 %1481
    %v1484 = vsel %vm1136, %v1212, %v1482
    %1485 = vst [vmem:[#allocation2] sm:$0xff] %v1484
    // Predicated region
    $region42: #{tpu_custom_call.1} parent=1 // pred_check
      _
    $region43: #{tpu_custom_call.1} parent=1 // pred_check_branch
      %1487 = sbr.rel (0) target = $region45
    $region44: #{tpu_custom_call.1} parent=1 // pred_region
      %s1489 = ssub.s32 128, 128
      %1490 = vsyncadd [#allocation3], %s1489
      %s1492 = sshll.u32 [#allocation2], 4
      %s1493 = int_to_ptr.vmem [resolvable:$true] %s1492
      %1495 = dma.vmem_to_hbm [thread:$0]  %s1493, 128, %s10, [#allocation3]
    $region45: #{tpu_custom_call.1} parent=1 // pred_fallthru
      _
    // Predicated region
    $region46: #{tpu_custom_call.1} parent=1 // pred_check
      _
    $region47: #{tpu_custom_call.1} parent=1 // pred_check_branch
      %1497 = sbr.rel (0) target = $region49
    $region48: #{tpu_custom_call.1} parent=1 // pred_region
      %1498 = dma.done [#allocation3], 128
    $region49: #{tpu_custom_call.1} parent=1 // pred_fallthru
      _
    %1499 = vsyncpa [#allocation3], 1

</llo_original>
